<compile_context>
chip_gen: v7x
topology: tpu7x:2x2x1
jax: 0.10.0
libtpu: 0.0.40
codegen_flags: <defaults>
</compile_context>

<pallas_src>
import jax
import jax.numpy as jnp
from jax import lax
from jax.experimental import pallas as pl
from jax.experimental.pallas import tpu as pltpu

EMBED_SIZE = 32
HIDDEN_SIZE = 32


# ---------------------------------------------------------------------------
# Fused Pallas kernel
# ---------------------------------------------------------------------------
def make_encoder_kernel(T, B, H, ndir):
    """Fused bi-LSTM recurrence + fwd/bwd sum + W_h linear, whole block in VMEM.

    Inputs:
      len_ref : (B, 1)  int32          per-sequence lengths (0 for padded rows)
      gx_ref  : (nd, T, B, 4H) f32     pre-projected gate pre-activations
                                       (x @ W_ih + b folded in), lane-dense
      whh_ref : (nd, H, 4H) f32        recurrent weights (gate order [i,f,g,o])
      wh_ref  : (H, H) f32             W_h (pre-transposed: x @ wh)
      bh_ref  : (1, H) f32             W_h bias
    Outputs:
      enc_ref  : (T, B, H)  summed bidirectional hidden states (zero past length)
      feat_ref : (T, B, H)  enc @ W_h + b_h
      hx_ref   : (B, H)     summed final hidden states
      cx_ref   : (B, H)     summed final cell states
    Scratch (bidirectional only):
      encb_ref : (T, B, H)  backward-direction outputs
    """

    def body(len_ref, gx_ref, whh_ref, wh_ref, bh_ref,
             enc_ref, feat_ref, hx_ref, cx_ref, encb_ref):
        # ---- loop invariants, hoisted once (no per-step broadcast_in_dim) ----
        len_b = jnp.broadcast_to(len_ref[...], (B, H))     # (B, H) int32
        zero = jnp.zeros((B, H), jnp.float32)

        gx_f = gx_ref.at[0]                                # (T, B, 4H) ref view
        whh_f = whh_ref[0]                                 # (H, 4H), held in vregs
        if ndir == 2:
            gx_b = gx_ref.at[1]
            whh_b = whh_ref[1]

        def cell(gx_d, whh_d, t, h, c):
            # One recurrent matmul per direction per step; x@W_ih + b is in gx.
            gates = gx_d[t] + jnp.dot(h, whh_d,
                                      preferred_element_type=jnp.float32)  # (B,4H)
            # 2 full-width EUP passes; gate extraction is lane-slice work.
            sg = jax.nn.sigmoid(gates)
            th = jnp.tanh(gates)
            i_g = sg[:, 0 * H:1 * H]
            f_g = sg[:, 1 * H:2 * H]
            g_g = th[:, 2 * H:3 * H]
            o_g = sg[:, 3 * H:4 * H]
            c_new = f_g * c + i_g * g_g
            h_new = o_g * jnp.tanh(c_new)
            valid = len_b > t                              # (B, H) bool
            return (jnp.where(valid, h_new, h),            # state freezes past len
                    jnp.where(valid, c_new, c),
                    jnp.where(valid, h_new, 0.0))          # output zero past len

        def step(i, carry):
            h_f, c_f, h_b, c_b = carry
            # forward direction at t = i: plain store, no read-modify-write
            h_f, c_f, out_f = cell(gx_f, whh_f, i, h_f, c_f)
            enc_ref[i] = out_f
            if ndir == 2:
                # backward direction at t = T-1-i (independent chain -> ILP)
                t_b = T - 1 - i
                h_b, c_b, out_b = cell(gx_b, whh_b, t_b, h_b, c_b)
                encb_ref[t_b] = out_b
            return h_f, c_f, h_b, c_b

        unroll = True if T <= 16 else 4                    # bounded vreg pressure
        h_f, c_f, h_b, c_b = lax.fori_loop(
            0, T, step, (zero, zero, zero, zero), unroll=unroll)

        if ndir == 2:
            hx_ref[...] = h_f + h_b
            cx_ref[...] = c_f + c_b
            enc = enc_ref[...] + encb_ref[...]             # one-shot fwd+bwd sum
            enc_ref[...] = enc
        else:
            hx_ref[...] = h_f
            cx_ref[...] = c_f
            enc = enc_ref[...]

        # ---- fused W_h epilogue: ONE flattened (T*B, H) @ (H, H) matmul ----
        feat = jnp.dot(enc.reshape(T * B, H), wh_ref[...],
                       preferred_element_type=jnp.float32) + bh_ref[...]
        feat_ref[...] = feat.reshape(T, B, H)

    if ndir == 2:
        def kernel(len_ref, gx_ref, whh_ref, wh_ref, bh_ref,
                   enc_ref, feat_ref, hx_ref, cx_ref, encb_ref):
            body(len_ref, gx_ref, whh_ref, wh_ref, bh_ref,
                 enc_ref, feat_ref, hx_ref, cx_ref, encb_ref)
    else:
        def kernel(len_ref, gx_ref, whh_ref, wh_ref, bh_ref,
                   enc_ref, feat_ref, hx_ref, cx_ref):
            body(len_ref, gx_ref, whh_ref, wh_ref, bh_ref,
                 enc_ref, feat_ref, hx_ref, cx_ref, None)
    return kernel


def _vmem():
    return pl.BlockSpec(memory_space=pltpu.MemorySpace.VMEM)


# ---------------------------------------------------------------------------
# Wrapper (jit-friendly: no host syncs)
# ---------------------------------------------------------------------------
def encoder_forward(sentences, params, bidirectional=True):
    B, T = sentences.shape
    H = HIDDEN_SIZE
    nd = 2 if bidirectional else 1
    B_pad = -(-B // 8) * 8                                  # f32 sublane padding

    sentences = sentences.astype(jnp.int32)
    lengths = (sentences != 0).sum(-1).astype(jnp.int32)    # (B,)
    sent_p = jnp.zeros((B_pad, T), jnp.int32).at[:B].set(sentences)
    len_p = jnp.zeros((B_pad, 1), jnp.int32).at[:B, 0].set(lengths)
    sent_tm = sent_p.T                                      # (T, B_pad) time-major

    # Gather embeddings of the actual tokens only and fold input projection +
    # bias into lane-dense gate pre-activations:
    #   gx[d, t, b, :] = emb[token[t,b]] @ W_ih[d] + b[d]     (4H = 128 lanes)
    emb_tm = jnp.take(params["embedding"], sent_tm, axis=0)          # (T, B_pad, E)
    gx = jnp.einsum("tbe,deg->dtbg", emb_tm, params["w_ih"],
                    precision=jax.lax.Precision.HIGHEST) \
        + params["b"][:, None, None, :]                              # (nd, T, B_pad, 4H)

    whh = params["w_hh"]                                             # (nd, H, 4H)
    wh, bh = params["w_h"], params["b_h"]

    out_shapes = (
        jax.ShapeDtypeStruct((T, B_pad, H), jnp.float32),   # enc (fwd+bwd sum)
        jax.ShapeDtypeStruct((T, B_pad, H), jnp.float32),   # feat = enc @ W_h + b_h
        jax.ShapeDtypeStruct((B_pad, H), jnp.float32),      # hx
        jax.ShapeDtypeStruct((B_pad, H), jnp.float32),      # cx
    )
    scratch = [pltpu.VMEM((T, B_pad, H), jnp.float32)] if nd == 2 else []

    f32 = 4
    slab_bytes = (len_p.size * 4 + gx.size * f32 + whh.size * f32
                  + wh.size * f32 + bh.size * f32
                  + 2 * T * B_pad * H * f32 + 2 * B_pad * H * f32
                  + (T * B_pad * H * f32 if nd == 2 else 0))
    # Explicit scoped-VMEM limit sized to the resident slabs (+headroom), capped
    # below v7x's 64 MiB physical ceiling.
    vmem_limit = int(min(max(2 * slab_bytes + (4 << 20), 16 << 20), 64 << 20))

    enc, feat, hx, cx = pl.pallas_call(
        make_encoder_kernel(T, B_pad, H, nd),
        out_shape=out_shapes,
        in_specs=[_vmem()] * 5,
        out_specs=tuple(_vmem() for _ in range(4)),
        scratch_shapes=scratch,
        compiler_params=pltpu.CompilerParams(vmem_limit_bytes=vmem_limit),
    )(len_p, gx, whh, wh, bh)

    # Outputs padded to static T: enc is zero past each length; feat past the
    # length equals b_h (matches reference arithmetic). Slice [:max_len] in the
    # caller if pad_packed_sequence-sized output is needed.
    return enc[:, :B], feat[:, :B], hx[:B], cx[:B]


# ---------------------------------------------------------------------------
# Pure-JAX reference (same forward semantics) for a numerical sanity check
# ---------------------------------------------------------------------------
def reference_forward(sentences, params, bidirectional=True):
    B, T = sentences.shape
    H = HIDDEN_SIZE
    hp = jax.lax.Precision.HIGHEST
    lengths = (sentences != 0).sum(-1)
    emb = jnp.take(params["embedding"], sentences, axis=0)  # (B, T, E)

    def run_dir(d, reverse):
        w_ih, w_hh, b = params["w_ih"][d], params["w_hh"][d], params["b"][d]
        h = jnp.zeros((B, H), jnp.float32)
        c = jnp.zeros((B, H), jnp.float32)
        outs = [None] * T
        ts = range(T - 1, -1, -1) if reverse else range(T)
        for t in ts:
            gates = (jnp.dot(emb[:, t], w_ih, precision=hp)
                     + jnp.dot(h, w_hh, precision=hp) + b)
            i_g = jax.nn.sigmoid(gates[:, 0 * H:1 * H])
            f_g = jax.nn.sigmoid(gates[:, 1 * H:2 * H])
            g_g = jnp.tanh(gates[:, 2 * H:3 * H])
            o_g = jax.nn.sigmoid(gates[:, 3 * H:4 * H])
            c_new = f_g * c + i_g * g_g
            h_new = o_g * jnp.tanh(c_new)
            valid = (lengths > t)[:, None]
            h = jnp.where(valid, h_new, h)
            c = jnp.where(valid, c_new, c)
            outs[t] = jnp.where(valid, h_new, 0.0)
        return jnp.stack(outs, 0), h, c

    out_f, h_f, c_f = run_dir(0, False)
    if bidirectional:
        out_b, h_b, c_b = run_dir(1, True)
        enc, hx, cx = out_f + out_b, h_f + h_b, c_f + c_b
    else:
        enc, hx, cx = out_f, h_f, c_f
    feat = jnp.einsum("tbh,hk->tbk", enc, params["w_h"], precision=hp) + params["b_h"]
    return enc, feat, hx, cx


# ---------------------------------------------------------------------------
# Deterministic parameter init (shapes mimic nn.Embedding / nn.LSTM / nn.Linear)
# ---------------------------------------------------------------------------
def init_params(key, source_size, embed_size, hidden_size, bidirectional=True):
    nd = 2 if bidirectional else 1
    ks = jax.random.split(key, 8)
    k = 1.0 / float(hidden_size) ** 0.5

    def unif(kk, shape):
        return jax.random.uniform(kk, shape, jnp.float32, -k, k)

    embedding = jax.random.normal(ks[0], (source_size, embed_size), jnp.float32)
    embedding = embedding.at[0].set(0.0)                    # padding_idx = 0

    return {
        "embedding": embedding,
        # weights stored pre-transposed: x @ W_ih (E,4H), h @ W_hh (H,4H);
        # gate order [i, f, g, o]
        "w_ih": unif(ks[1], (nd, embed_size, 4 * hidden_size)),
        "w_hh": unif(ks[2], (nd, hidden_size, 4 * hidden_size)),
        "b":    unif(ks[3], (nd, 4 * hidden_size)) + unif(ks[4], (nd, 4 * hidden_size)),
        # W_h: Linear(H, H), stored transposed so feat = x @ w_h + b_h
        "w_h":  unif(ks[5], (hidden_size, hidden_size)),
        "b_h":  unif(ks[6], (1, hidden_size)),
    }


# ---------------------------------------------------------------------------
if __name__ == "__main__":
    import numpy as np

    key = jax.random.PRNGKey(0)
    k_tok, k_par = jax.random.split(key)

    B, T, VOCAB = 2, 8, 50
    bidirectional = True

    tokens = jax.random.randint(k_tok, (B, T), 1, VOCAB)
    seq_lens = jnp.array([T, 5], dtype=jnp.int32)           # second sequence padded
    mask = jnp.arange(T)[None, :] < seq_lens[:, None]
    sentences = jnp.where(mask, tokens, 0).astype(jnp.int32)  # (B, T), 0 = pad

    params = init_params(k_par, VOCAB, EMBED_SIZE, HIDDEN_SIZE, bidirectional)

    fwd = jax.jit(encoder_forward, static_argnames=("bidirectional",))
    enc_out, enc_feat, hx, cx = fwd(sentences, params, bidirectional=bidirectional)
    jax.block_until_ready((enc_out, enc_feat, hx, cx))

    assert enc_out.shape == (T, B, HIDDEN_SIZE)
    assert enc_feat.shape == (T, B, HIDDEN_SIZE)
    assert hx.shape == (B, HIDDEN_SIZE)
    assert cx.shape == (B, HIDDEN_SIZE)

    # numerical sanity check vs pure-JAX reference (all-f32 -> tight tolerance)
    r_enc, r_feat, r_hx, r_cx = reference_forward(sentences, params, bidirectional)
    for got, ref in ((enc_out, r_enc), (enc_feat, r_feat), (hx, r_hx), (cx, r_cx)):
        np.testing.assert_allclose(np.asarray(got), np.asarray(ref),
                                   atol=5e-5, rtol=5e-5)

    print("KERNEL_OK")
</pallas_src>

<mosaic_0001>
module attributes {stable_mosaic.version = 11 : i64} {
  func.func @kernel(%arg0: memref<8x1xi32, #tpu.memory_space<vmem>>, %arg1: memref<2x8x8x128xf32, #tpu.memory_space<vmem>>, %arg2: memref<2x32x128xf32, #tpu.memory_space<vmem>>, %arg3: memref<32x32xf32, #tpu.memory_space<vmem>>, %arg4: memref<1x32xf32, #tpu.memory_space<vmem>>, %arg5: memref<8x8x32xf32, #tpu.memory_space<vmem>>, %arg6: memref<8x8x32xf32, #tpu.memory_space<vmem>>, %arg7: memref<8x32xf32, #tpu.memory_space<vmem>>, %arg8: memref<8x32xf32, #tpu.memory_space<vmem>>, %arg9: memref<8x8x32xf32, #tpu.memory_space<vmem>>) attributes {dimension_semantics = [], scalar_prefetch = 0 : i64, scratch_operands = 1 : i64, tpu.core_type = #tpu.core_type<tc>} {
    %c0 = arith.constant 0 : index
    %c0_0 = arith.constant 0 : index
    %0 = vector.load %arg0[%c0, %c0_0] : memref<8x1xi32, #tpu.memory_space<vmem>>, vector<8x1xi32>
    %1 = vector.shape_cast %0 : vector<8x1xi32> to vector<8x1xi32>
    %2 = vector.broadcast %1 : vector<8x1xi32> to vector<8x32xi32>
    %cst = arith.constant 0.000000e+00 : f32
    %3 = vector.broadcast %cst : f32 to vector<8x32xf32>
    %c0_1 = arith.constant 0 : index
    %c0_2 = arith.constant 0 : index
    %c0_3 = arith.constant 0 : index
    %4 = vector.load %arg2[%c0_1, %c0_2, %c0_3] : memref<2x32x128xf32, #tpu.memory_space<vmem>>, vector<1x32x128xf32>
    %5 = vector.shape_cast %4 : vector<1x32x128xf32> to vector<32x128xf32>
    %c1 = arith.constant 1 : index
    %c0_4 = arith.constant 0 : index
    %c0_5 = arith.constant 0 : index
    %6 = vector.load %arg2[%c1, %c0_4, %c0_5] : memref<2x32x128xf32, #tpu.memory_space<vmem>>, vector<1x32x128xf32>
    %7 = vector.shape_cast %6 : vector<1x32x128xf32> to vector<32x128xf32>
    %c0_i32 = arith.constant 0 : i32
    %c1_i32 = arith.constant 1 : i32
    %c0_i32_6 = arith.constant 0 : i32
    %c0_i32_7 = arith.constant 0 : i32
    %c0_i32_8 = arith.constant 0 : i32
    %c0_i32_9 = arith.constant 0 : i32
    %8 = tpu.memref_slice %arg1[%c0_i32, %c0_i32_7, %c0_i32_8, %c0_i32_9] : memref<2x8x8x128xf32, #tpu.memory_space<vmem>> -> memref<1x8x8x128xf32, #tpu.memory_space<vmem>>
    %9 = tpu.memref_squeeze %8 : memref<1x8x8x128xf32, #tpu.memory_space<vmem>> -> memref<8x8x128xf32, #tpu.memory_space<vmem>>
    %10 = arith.index_cast %c0_i32_6 : i32 to index
    %c0_10 = arith.constant 0 : index
    %c0_11 = arith.constant 0 : index
    %11 = vector.load %9[%10, %c0_10, %c0_11] : memref<8x8x128xf32, #tpu.memory_space<vmem>>, vector<1x8x128xf32>
    %12 = vector.shape_cast %11 : vector<1x8x128xf32> to vector<8x128xf32>
    %cst_12 = arith.constant dense<0.000000e+00> : vector<8x128xf32>
    %13 = tpu.matmul %3, %5, %cst_12 {dimension_numbers = #tpu.dot_dimension_numbers<[1], [0], [0], [1], [0, 0, 1, 1], [], []>} : vector<8x32xf32>, vector<32x128xf32>, vector<8x128xf32> -> vector<8x128xf32>
    %14 = arith.addf %12, %13 : vector<8x128xf32>
    %15 = arith.negf %14 : vector<8x128xf32>
    %16 = math.exp %15 : vector<8x128xf32>
    %cst_13 = arith.constant 1.000000e+00 : f32
    %17 = vector.broadcast %cst_13 : f32 to vector<8x128xf32>
    %18 = arith.addf %17, %16 : vector<8x128xf32>
    %19 = arith.divf %17, %18 : vector<8x128xf32>
    %20 = math.tanh %14 : vector<8x128xf32>
    %21 = vector.extract_strided_slice %19 {offsets = [0, 0], sizes = [8, 32], strides = [1, 1]} : vector<8x128xf32> to vector<8x32xf32>
    %22 = vector.extract_strided_slice %19 {offsets = [0, 32], sizes = [8, 32], strides = [1, 1]} : vector<8x128xf32> to vector<8x32xf32>
    %23 = vector.extract_strided_slice %20 {offsets = [0, 64], sizes = [8, 32], strides = [1, 1]} : vector<8x128xf32> to vector<8x32xf32>
    %24 = vector.extract_strided_slice %19 {offsets = [0, 96], sizes = [8, 32], strides = [1, 1]} : vector<8x128xf32> to vector<8x32xf32>
    %25 = arith.mulf %22, %3 : vector<8x32xf32>
    %26 = arith.mulf %21, %23 : vector<8x32xf32>
    %27 = arith.addf %25, %26 : vector<8x32xf32>
    %28 = math.tanh %27 : vector<8x32xf32>
    %29 = arith.mulf %24, %28 : vector<8x32xf32>
    %30 = vector.broadcast %c0_i32_6 : i32 to vector<8x32xi32>
    %31 = arith.cmpi sgt, %2, %30 : vector<8x32xi32>
    %32 = arith.select %31, %29, %3 : vector<8x32xi1>, vector<8x32xf32>
    %33 = arith.select %31, %27, %3 : vector<8x32xi1>, vector<8x32xf32>
    %cst_14 = arith.constant 0.000000e+00 : f32
    %34 = vector.broadcast %cst_14 : f32 to vector<8x32xf32>
    %35 = arith.select %31, %29, %34 : vector<8x32xi1>, vector<8x32xf32>
    %36 = arith.index_cast %c0_i32_6 : i32 to index
    %c0_15 = arith.constant 0 : index
    %c0_16 = arith.constant 0 : index
    %37 = vector.load %arg5[%36, %c0_15, %c0_16] : memref<8x8x32xf32, #tpu.memory_space<vmem>>, vector<1x8x32xf32>
    %38 = vector.shape_cast %37 : vector<1x8x32xf32> to vector<8x32xf32>
    %39 = vector.shape_cast %35 : vector<8x32xf32> to vector<1x8x32xf32>
    tpu.vector_store %arg5[%36, %c0_15, %c0_16], %39 {strides = array<i32>} : memref<8x8x32xf32, #tpu.memory_space<vmem>>, vector<1x8x32xf32>,
    %c7_i32 = arith.constant 7 : i32
    %40 = arith.subi %c7_i32, %c0_i32_6 : i32
    %c0_i32_17 = arith.constant 0 : i32
    %c0_i32_18 = arith.constant 0 : i32
    %c0_i32_19 = arith.constant 0 : i32
    %41 = tpu.memref_slice %arg1[%c1_i32, %c0_i32_17, %c0_i32_18, %c0_i32_19] : memref<2x8x8x128xf32, #tpu.memory_space<vmem>> -> memref<1x8x8x128xf32, #tpu.memory_space<vmem>>
    %42 = tpu.memref_squeeze %41 : memref<1x8x8x128xf32, #tpu.memory_space<vmem>> -> memref<8x8x128xf32, #tpu.memory_space<vmem>>
    %43 = arith.index_cast %40 : i32 to index
    %c0_20 = arith.constant 0 : index
    %c0_21 = arith.constant 0 : index
    %44 = vector.load %42[%43, %c0_20, %c0_21] : memref<8x8x128xf32, #tpu.memory_space<vmem>>, vector<1x8x128xf32>
    %45 = vector.shape_cast %44 : vector<1x8x128xf32> to vector<8x128xf32>
    %cst_22 = arith.constant dense<0.000000e+00> : vector<8x128xf32>
    %46 = tpu.matmul %3, %7, %cst_22 {dimension_numbers = #tpu.dot_dimension_numbers<[1], [0], [0], [1], [0, 0, 1, 1], [], []>} : vector<8x32xf32>, vector<32x128xf32>, vector<8x128xf32> -> vector<8x128xf32>
    %47 = arith.addf %45, %46 : vector<8x128xf32>
    %48 = arith.negf %47 : vector<8x128xf32>
    %49 = math.exp %48 : vector<8x128xf32>
    %cst_23 = arith.constant 1.000000e+00 : f32
    %50 = vector.broadcast %cst_23 : f32 to vector<8x128xf32>
    %51 = arith.addf %50, %49 : vector<8x128xf32>
    %52 = arith.divf %50, %51 : vector<8x128xf32>
    %53 = math.tanh %47 : vector<8x128xf32>
    %54 = vector.extract_strided_slice %52 {offsets = [0, 0], sizes = [8, 32], strides = [1, 1]} : vector<8x128xf32> to vector<8x32xf32>
    %55 = vector.extract_strided_slice %52 {offsets = [0, 32], sizes = [8, 32], strides = [1, 1]} : vector<8x128xf32> to vector<8x32xf32>
    %56 = vector.extract_strided_slice %53 {offsets = [0, 64], sizes = [8, 32], strides = [1, 1]} : vector<8x128xf32> to vector<8x32xf32>
    %57 = vector.extract_strided_slice %52 {offsets = [0, 96], sizes = [8, 32], strides = [1, 1]} : vector<8x128xf32> to vector<8x32xf32>
    %58 = arith.mulf %55, %3 : vector<8x32xf32>
    %59 = arith.mulf %54, %56 : vector<8x32xf32>
    %60 = arith.addf %58, %59 : vector<8x32xf32>
    %61 = math.tanh %60 : vector<8x32xf32>
    %62 = arith.mulf %57, %61 : vector<8x32xf32>
    %63 = vector.broadcast %40 : i32 to vector<8x32xi32>
    %64 = arith.cmpi sgt, %2, %63 : vector<8x32xi32>
    %65 = arith.select %64, %62, %3 : vector<8x32xi1>, vector<8x32xf32>
    %66 = arith.select %64, %60, %3 : vector<8x32xi1>, vector<8x32xf32>
    %cst_24 = arith.constant 0.000000e+00 : f32
    %67 = vector.broadcast %cst_24 : f32 to vector<8x32xf32>
    %68 = arith.select %64, %62, %67 : vector<8x32xi1>, vector<8x32xf32>
    %69 = arith.index_cast %40 : i32 to index
    %c0_25 = arith.constant 0 : index
    %c0_26 = arith.constant 0 : index
    %70 = vector.load %arg9[%69, %c0_25, %c0_26] : memref<8x8x32xf32, #tpu.memory_space<vmem>>, vector<1x8x32xf32>
    %71 = vector.shape_cast %70 : vector<1x8x32xf32> to vector<8x32xf32>
    %72 = vector.shape_cast %68 : vector<8x32xf32> to vector<1x8x32xf32>
    tpu.vector_store %arg9[%69, %c0_25, %c0_26], %72 {strides = array<i32>} : memref<8x8x32xf32, #tpu.memory_space<vmem>>, vector<1x8x32xf32>,
    %c1_i32_27 = arith.constant 1 : i32
    %c0_i32_28 = arith.constant 0 : i32
    %c0_i32_29 = arith.constant 0 : i32
    %c0_i32_30 = arith.constant 0 : i32
    %73 = tpu.memref_slice %arg1[%c0_i32, %c0_i32_28, %c0_i32_29, %c0_i32_30] : memref<2x8x8x128xf32, #tpu.memory_space<vmem>> -> memref<1x8x8x128xf32, #tpu.memory_space<vmem>>
    %74 = tpu.memref_squeeze %73 : memref<1x8x8x128xf32, #tpu.memory_space<vmem>> -> memref<8x8x128xf32, #tpu.memory_space<vmem>>
    %75 = arith.index_cast %c1_i32_27 : i32 to index
    %c0_31 = arith.constant 0 : index
    %c0_32 = arith.constant 0 : index
    %76 = vector.load %74[%75, %c0_31, %c0_32] : memref<8x8x128xf32, #tpu.memory_space<vmem>>, vector<1x8x128xf32>
    %77 = vector.shape_cast %76 : vector<1x8x128xf32> to vector<8x128xf32>
    %cst_33 = arith.constant dense<0.000000e+00> : vector<8x128xf32>
    %78 = tpu.matmul %32, %5, %cst_33 {dimension_numbers = #tpu.dot_dimension_numbers<[1], [0], [0], [1], [0, 0, 1, 1], [], []>} : vector<8x32xf32>, vector<32x128xf32>, vector<8x128xf32> -> vector<8x128xf32>
    %79 = arith.addf %77, %78 : vector<8x128xf32>
    %80 = arith.negf %79 : vector<8x128xf32>
    %81 = math.exp %80 : vector<8x128xf32>
    %cst_34 = arith.constant 1.000000e+00 : f32
    %82 = vector.broadcast %cst_34 : f32 to vector<8x128xf32>
    %83 = arith.addf %82, %81 : vector<8x128xf32>
    %84 = arith.divf %82, %83 : vector<8x128xf32>
    %85 = math.tanh %79 : vector<8x128xf32>
    %86 = vector.extract_strided_slice %84 {offsets = [0, 0], sizes = [8, 32], strides = [1, 1]} : vector<8x128xf32> to vector<8x32xf32>
    %87 = vector.extract_strided_slice %84 {offsets = [0, 32], sizes = [8, 32], strides = [1, 1]} : vector<8x128xf32> to vector<8x32xf32>
    %88 = vector.extract_strided_slice %85 {offsets = [0, 64], sizes = [8, 32], strides = [1, 1]} : vector<8x128xf32> to vector<8x32xf32>
    %89 = vector.extract_strided_slice %84 {offsets = [0, 96], sizes = [8, 32], strides = [1, 1]} : vector<8x128xf32> to vector<8x32xf32>
    %90 = arith.mulf %87, %33 : vector<8x32xf32>
    %91 = arith.mulf %86, %88 : vector<8x32xf32>
    %92 = arith.addf %90, %91 : vector<8x32xf32>
    %93 = math.tanh %92 : vector<8x32xf32>
    %94 = arith.mulf %89, %93 : vector<8x32xf32>
    %95 = vector.broadcast %c1_i32_27 : i32 to vector<8x32xi32>
    %96 = arith.cmpi sgt, %2, %95 : vector<8x32xi32>
    %97 = arith.select %96, %94, %32 : vector<8x32xi1>, vector<8x32xf32>
    %98 = arith.select %96, %92, %33 : vector<8x32xi1>, vector<8x32xf32>
    %cst_35 = arith.constant 0.000000e+00 : f32
    %99 = vector.broadcast %cst_35 : f32 to vector<8x32xf32>
    %100 = arith.select %96, %94, %99 : vector<8x32xi1>, vector<8x32xf32>
    %101 = arith.index_cast %c1_i32_27 : i32 to index
    %c0_36 = arith.constant 0 : index
    %c0_37 = arith.constant 0 : index
    %102 = vector.load %arg5[%101, %c0_36, %c0_37] : memref<8x8x32xf32, #tpu.memory_space<vmem>>, vector<1x8x32xf32>
    %103 = vector.shape_cast %102 : vector<1x8x32xf32> to vector<8x32xf32>
    %104 = vector.shape_cast %100 : vector<8x32xf32> to vector<1x8x32xf32>
    tpu.vector_store %arg5[%101, %c0_36, %c0_37], %104 {strides = array<i32>} : memref<8x8x32xf32, #tpu.memory_space<vmem>>, vector<1x8x32xf32>,
    %c7_i32_38 = arith.constant 7 : i32
    %105 = arith.subi %c7_i32_38, %c1_i32_27 : i32
    %c0_i32_39 = arith.constant 0 : i32
    %c0_i32_40 = arith.constant 0 : i32
    %c0_i32_41 = arith.constant 0 : i32
    %106 = tpu.memref_slice %arg1[%c1_i32, %c0_i32_39, %c0_i32_40, %c0_i32_41] : memref<2x8x8x128xf32, #tpu.memory_space<vmem>> -> memref<1x8x8x128xf32, #tpu.memory_space<vmem>>
    %107 = tpu.memref_squeeze %106 : memref<1x8x8x128xf32, #tpu.memory_space<vmem>> -> memref<8x8x128xf32, #tpu.memory_space<vmem>>
    %108 = arith.index_cast %105 : i32 to index
    %c0_42 = arith.constant 0 : index
    %c0_43 = arith.constant 0 : index
    %109 = vector.load %107[%108, %c0_42, %c0_43] : memref<8x8x128xf32, #tpu.memory_space<vmem>>, vector<1x8x128xf32>
    %110 = vector.shape_cast %109 : vector<1x8x128xf32> to vector<8x128xf32>
    %cst_44 = arith.constant dense<0.000000e+00> : vector<8x128xf32>
    %111 = tpu.matmul %65, %7, %cst_44 {dimension_numbers = #tpu.dot_dimension_numbers<[1], [0], [0], [1], [0, 0, 1, 1], [], []>} : vector<8x32xf32>, vector<32x128xf32>, vector<8x128xf32> -> vector<8x128xf32>
    %112 = arith.addf %110, %111 : vector<8x128xf32>
    %113 = arith.negf %112 : vector<8x128xf32>
    %114 = math.exp %113 : vector<8x128xf32>
    %cst_45 = arith.constant 1.000000e+00 : f32
    %115 = vector.broadcast %cst_45 : f32 to vector<8x128xf32>
    %116 = arith.addf %115, %114 : vector<8x128xf32>
    %117 = arith.divf %115, %116 : vector<8x128xf32>
    %118 = math.tanh %112 : vector<8x128xf32>
    %119 = vector.extract_strided_slice %117 {offsets = [0, 0], sizes = [8, 32], strides = [1, 1]} : vector<8x128xf32> to vector<8x32xf32>
    %120 = vector.extract_strided_slice %117 {offsets = [0, 32], sizes = [8, 32], strides = [1, 1]} : vector<8x128xf32> to vector<8x32xf32>
    %121 = vector.extract_strided_slice %118 {offsets = [0, 64], sizes = [8, 32], strides = [1, 1]} : vector<8x128xf32> to vector<8x32xf32>
    %122 = vector.extract_strided_slice %117 {offsets = [0, 96], sizes = [8, 32], strides = [1, 1]} : vector<8x128xf32> to vector<8x32xf32>
    %123 = arith.mulf %120, %66 : vector<8x32xf32>
    %124 = arith.mulf %119, %121 : vector<8x32xf32>
    %125 = arith.addf %123, %124 : vector<8x32xf32>
    %126 = math.tanh %125 : vector<8x32xf32>
    %127 = arith.mulf %122, %126 : vector<8x32xf32>
    %128 = vector.broadcast %105 : i32 to vector<8x32xi32>
    %129 = arith.cmpi sgt, %2, %128 : vector<8x32xi32>
    %130 = arith.select %129, %127, %65 : vector<8x32xi1>, vector<8x32xf32>
    %131 = arith.select %129, %125, %66 : vector<8x32xi1>, vector<8x32xf32>
    %cst_46 = arith.constant 0.000000e+00 : f32
    %132 = vector.broadcast %cst_46 : f32 to vector<8x32xf32>
    %133 = arith.select %129, %127, %132 : vector<8x32xi1>, vector<8x32xf32>
    %134 = arith.index_cast %105 : i32 to index
    %c0_47 = arith.constant 0 : index
    %c0_48 = arith.constant 0 : index
    %135 = vector.load %arg9[%134, %c0_47, %c0_48] : memref<8x8x32xf32, #tpu.memory_space<vmem>>, vector<1x8x32xf32>
    %136 = vector.shape_cast %135 : vector<1x8x32xf32> to vector<8x32xf32>
    %137 = vector.shape_cast %133 : vector<8x32xf32> to vector<1x8x32xf32>
    tpu.vector_store %arg9[%134, %c0_47, %c0_48], %137 {strides = array<i32>} : memref<8x8x32xf32, #tpu.memory_space<vmem>>, vector<1x8x32xf32>,
    %c2_i32 = arith.constant 2 : i32
    %c0_i32_49 = arith.constant 0 : i32
    %c0_i32_50 = arith.constant 0 : i32
    %c0_i32_51 = arith.constant 0 : i32
    %138 = tpu.memref_slice %arg1[%c0_i32, %c0_i32_49, %c0_i32_50, %c0_i32_51] : memref<2x8x8x128xf32, #tpu.memory_space<vmem>> -> memref<1x8x8x128xf32, #tpu.memory_space<vmem>>
    %139 = tpu.memref_squeeze %138 : memref<1x8x8x128xf32, #tpu.memory_space<vmem>> -> memref<8x8x128xf32, #tpu.memory_space<vmem>>
    %140 = arith.index_cast %c2_i32 : i32 to index
    %c0_52 = arith.constant 0 : index
    %c0_53 = arith.constant 0 : index
    %141 = vector.load %139[%140, %c0_52, %c0_53] : memref<8x8x128xf32, #tpu.memory_space<vmem>>, vector<1x8x128xf32>
    %142 = vector.shape_cast %141 : vector<1x8x128xf32> to vector<8x128xf32>
    %cst_54 = arith.constant dense<0.000000e+00> : vector<8x128xf32>
    %143 = tpu.matmul %97, %5, %cst_54 {dimension_numbers = #tpu.dot_dimension_numbers<[1], [0], [0], [1], [0, 0, 1, 1], [], []>} : vector<8x32xf32>, vector<32x128xf32>, vector<8x128xf32> -> vector<8x128xf32>
    %144 = arith.addf %142, %143 : vector<8x128xf32>
    %145 = arith.negf %144 : vector<8x128xf32>
    %146 = math.exp %145 : vector<8x128xf32>
    %cst_55 = arith.constant 1.000000e+00 : f32
    %147 = vector.broadcast %cst_55 : f32 to vector<8x128xf32>
    %148 = arith.addf %147, %146 : vector<8x128xf32>
    %149 = arith.divf %147, %148 : vector<8x128xf32>
    %150 = math.tanh %144 : vector<8x128xf32>
    %151 = vector.extract_strided_slice %149 {offsets = [0, 0], sizes = [8, 32], strides = [1, 1]} : vector<8x128xf32> to vector<8x32xf32>
    %152 = vector.extract_strided_slice %149 {offsets = [0, 32], sizes = [8, 32], strides = [1, 1]} : vector<8x128xf32> to vector<8x32xf32>
    %153 = vector.extract_strided_slice %150 {offsets = [0, 64], sizes = [8, 32], strides = [1, 1]} : vector<8x128xf32> to vector<8x32xf32>
    %154 = vector.extract_strided_slice %149 {offsets = [0, 96], sizes = [8, 32], strides = [1, 1]} : vector<8x128xf32> to vector<8x32xf32>
    %155 = arith.mulf %152, %98 : vector<8x32xf32>
    %156 = arith.mulf %151, %153 : vector<8x32xf32>
    %157 = arith.addf %155, %156 : vector<8x32xf32>
    %158 = math.tanh %157 : vector<8x32xf32>
    %159 = arith.mulf %154, %158 : vector<8x32xf32>
    %160 = vector.broadcast %c2_i32 : i32 to vector<8x32xi32>
    %161 = arith.cmpi sgt, %2, %160 : vector<8x32xi32>
    %162 = arith.select %161, %159, %97 : vector<8x32xi1>, vector<8x32xf32>
    %163 = arith.select %161, %157, %98 : vector<8x32xi1>, vector<8x32xf32>
    %cst_56 = arith.constant 0.000000e+00 : f32
    %164 = vector.broadcast %cst_56 : f32 to vector<8x32xf32>
    %165 = arith.select %161, %159, %164 : vector<8x32xi1>, vector<8x32xf32>
    %166 = arith.index_cast %c2_i32 : i32 to index
    %c0_57 = arith.constant 0 : index
    %c0_58 = arith.constant 0 : index
    %167 = vector.load %arg5[%166, %c0_57, %c0_58] : memref<8x8x32xf32, #tpu.memory_space<vmem>>, vector<1x8x32xf32>
    %168 = vector.shape_cast %167 : vector<1x8x32xf32> to vector<8x32xf32>
    %169 = vector.shape_cast %165 : vector<8x32xf32> to vector<1x8x32xf32>
    tpu.vector_store %arg5[%166, %c0_57, %c0_58], %169 {strides = array<i32>} : memref<8x8x32xf32, #tpu.memory_space<vmem>>, vector<1x8x32xf32>,
    %c7_i32_59 = arith.constant 7 : i32
    %170 = arith.subi %c7_i32_59, %c2_i32 : i32
    %c0_i32_60 = arith.constant 0 : i32
    %c0_i32_61 = arith.constant 0 : i32
    %c0_i32_62 = arith.constant 0 : i32
    %171 = tpu.memref_slice %arg1[%c1_i32, %c0_i32_60, %c0_i32_61, %c0_i32_62] : memref<2x8x8x128xf32, #tpu.memory_space<vmem>> -> memref<1x8x8x128xf32, #tpu.memory_space<vmem>>
    %172 = tpu.memref_squeeze %171 : memref<1x8x8x128xf32, #tpu.memory_space<vmem>> -> memref<8x8x128xf32, #tpu.memory_space<vmem>>
    %173 = arith.index_cast %170 : i32 to index
    %c0_63 = arith.constant 0 : index
    %c0_64 = arith.constant 0 : index
    %174 = vector.load %172[%173, %c0_63, %c0_64] : memref<8x8x128xf32, #tpu.memory_space<vmem>>, vector<1x8x128xf32>
    %175 = vector.shape_cast %174 : vector<1x8x128xf32> to vector<8x128xf32>
    %cst_65 = arith.constant dense<0.000000e+00> : vector<8x128xf32>
    %176 = tpu.matmul %130, %7, %cst_65 {dimension_numbers = #tpu.dot_dimension_numbers<[1], [0], [0], [1], [0, 0, 1, 1], [], []>} : vector<8x32xf32>, vector<32x128xf32>, vector<8x128xf32> -> vector<8x128xf32>
    %177 = arith.addf %175, %176 : vector<8x128xf32>
    %178 = arith.negf %177 : vector<8x128xf32>
    %179 = math.exp %178 : vector<8x128xf32>
    %cst_66 = arith.constant 1.000000e+00 : f32
    %180 = vector.broadcast %cst_66 : f32 to vector<8x128xf32>
    %181 = arith.addf %180, %179 : vector<8x128xf32>
    %182 = arith.divf %180, %181 : vector<8x128xf32>
    %183 = math.tanh %177 : vector<8x128xf32>
    %184 = vector.extract_strided_slice %182 {offsets = [0, 0], sizes = [8, 32], strides = [1, 1]} : vector<8x128xf32> to vector<8x32xf32>
    %185 = vector.extract_strided_slice %182 {offsets = [0, 32], sizes = [8, 32], strides = [1, 1]} : vector<8x128xf32> to vector<8x32xf32>
    %186 = vector.extract_strided_slice %183 {offsets = [0, 64], sizes = [8, 32], strides = [1, 1]} : vector<8x128xf32> to vector<8x32xf32>
    %187 = vector.extract_strided_slice %182 {offsets = [0, 96], sizes = [8, 32], strides = [1, 1]} : vector<8x128xf32> to vector<8x32xf32>
    %188 = arith.mulf %185, %131 : vector<8x32xf32>
    %189 = arith.mulf %184, %186 : vector<8x32xf32>
    %190 = arith.addf %188, %189 : vector<8x32xf32>
    %191 = math.tanh %190 : vector<8x32xf32>
    %192 = arith.mulf %187, %191 : vector<8x32xf32>
    %193 = vector.broadcast %170 : i32 to vector<8x32xi32>
    %194 = arith.cmpi sgt, %2, %193 : vector<8x32xi32>
    %195 = arith.select %194, %192, %130 : vector<8x32xi1>, vector<8x32xf32>
    %196 = arith.select %194, %190, %131 : vector<8x32xi1>, vector<8x32xf32>
    %cst_67 = arith.constant 0.000000e+00 : f32
    %197 = vector.broadcast %cst_67 : f32 to vector<8x32xf32>
    %198 = arith.select %194, %192, %197 : vector<8x32xi1>, vector<8x32xf32>
    %199 = arith.index_cast %170 : i32 to index
    %c0_68 = arith.constant 0 : index
    %c0_69 = arith.constant 0 : index
    %200 = vector.load %arg9[%199, %c0_68, %c0_69] : memref<8x8x32xf32, #tpu.memory_space<vmem>>, vector<1x8x32xf32>
    %201 = vector.shape_cast %200 : vector<1x8x32xf32> to vector<8x32xf32>
    %202 = vector.shape_cast %198 : vector<8x32xf32> to vector<1x8x32xf32>
    tpu.vector_store %arg9[%199, %c0_68, %c0_69], %202 {strides = array<i32>} : memref<8x8x32xf32, #tpu.memory_space<vmem>>, vector<1x8x32xf32>,
    %c3_i32 = arith.constant 3 : i32
    %c0_i32_70 = arith.constant 0 : i32
    %c0_i32_71 = arith.constant 0 : i32
    %c0_i32_72 = arith.constant 0 : i32
    %203 = tpu.memref_slice %arg1[%c0_i32, %c0_i32_70, %c0_i32_71, %c0_i32_72] : memref<2x8x8x128xf32, #tpu.memory_space<vmem>> -> memref<1x8x8x128xf32, #tpu.memory_space<vmem>>
    %204 = tpu.memref_squeeze %203 : memref<1x8x8x128xf32, #tpu.memory_space<vmem>> -> memref<8x8x128xf32, #tpu.memory_space<vmem>>
    %205 = arith.index_cast %c3_i32 : i32 to index
    %c0_73 = arith.constant 0 : index
    %c0_74 = arith.constant 0 : index
    %206 = vector.load %204[%205, %c0_73, %c0_74] : memref<8x8x128xf32, #tpu.memory_space<vmem>>, vector<1x8x128xf32>
    %207 = vector.shape_cast %206 : vector<1x8x128xf32> to vector<8x128xf32>
    %cst_75 = arith.constant dense<0.000000e+00> : vector<8x128xf32>
    %208 = tpu.matmul %162, %5, %cst_75 {dimension_numbers = #tpu.dot_dimension_numbers<[1], [0], [0], [1], [0, 0, 1, 1], [], []>} : vector<8x32xf32>, vector<32x128xf32>, vector<8x128xf32> -> vector<8x128xf32>
    %209 = arith.addf %207, %208 : vector<8x128xf32>
    %210 = arith.negf %209 : vector<8x128xf32>
    %211 = math.exp %210 : vector<8x128xf32>
    %cst_76 = arith.constant 1.000000e+00 : f32
    %212 = vector.broadcast %cst_76 : f32 to vector<8x128xf32>
    %213 = arith.addf %212, %211 : vector<8x128xf32>
    %214 = arith.divf %212, %213 : vector<8x128xf32>
    %215 = math.tanh %209 : vector<8x128xf32>
    %216 = vector.extract_strided_slice %214 {offsets = [0, 0], sizes = [8, 32], strides = [1, 1]} : vector<8x128xf32> to vector<8x32xf32>
    %217 = vector.extract_strided_slice %214 {offsets = [0, 32], sizes = [8, 32], strides = [1, 1]} : vector<8x128xf32> to vector<8x32xf32>
    %218 = vector.extract_strided_slice %215 {offsets = [0, 64], sizes = [8, 32], strides = [1, 1]} : vector<8x128xf32> to vector<8x32xf32>
    %219 = vector.extract_strided_slice %214 {offsets = [0, 96], sizes = [8, 32], strides = [1, 1]} : vector<8x128xf32> to vector<8x32xf32>
    %220 = arith.mulf %217, %163 : vector<8x32xf32>
    %221 = arith.mulf %216, %218 : vector<8x32xf32>
    %222 = arith.addf %220, %221 : vector<8x32xf32>
    %223 = math.tanh %222 : vector<8x32xf32>
    %224 = arith.mulf %219, %223 : vector<8x32xf32>
    %225 = vector.broadcast %c3_i32 : i32 to vector<8x32xi32>
    %226 = arith.cmpi sgt, %2, %225 : vector<8x32xi32>
    %227 = arith.select %226, %224, %162 : vector<8x32xi1>, vector<8x32xf32>
    %228 = arith.select %226, %222, %163 : vector<8x32xi1>, vector<8x32xf32>
    %cst_77 = arith.constant 0.000000e+00 : f32
    %229 = vector.broadcast %cst_77 : f32 to vector<8x32xf32>
    %230 = arith.select %226, %224, %229 : vector<8x32xi1>, vector<8x32xf32>
    %231 = arith.index_cast %c3_i32 : i32 to index
    %c0_78 = arith.constant 0 : index
    %c0_79 = arith.constant 0 : index
    %232 = vector.load %arg5[%231, %c0_78, %c0_79] : memref<8x8x32xf32, #tpu.memory_space<vmem>>, vector<1x8x32xf32>
    %233 = vector.shape_cast %232 : vector<1x8x32xf32> to vector<8x32xf32>
    %234 = vector.shape_cast %230 : vector<8x32xf32> to vector<1x8x32xf32>
    tpu.vector_store %arg5[%231, %c0_78, %c0_79], %234 {strides = array<i32>} : memref<8x8x32xf32, #tpu.memory_space<vmem>>, vector<1x8x32xf32>,
    %c7_i32_80 = arith.constant 7 : i32
    %235 = arith.subi %c7_i32_80, %c3_i32 : i32
    %c0_i32_81 = arith.constant 0 : i32
    %c0_i32_82 = arith.constant 0 : i32
    %c0_i32_83 = arith.constant 0 : i32
    %236 = tpu.memref_slice %arg1[%c1_i32, %c0_i32_81, %c0_i32_82, %c0_i32_83] : memref<2x8x8x128xf32, #tpu.memory_space<vmem>> -> memref<1x8x8x128xf32, #tpu.memory_space<vmem>>
    %237 = tpu.memref_squeeze %236 : memref<1x8x8x128xf32, #tpu.memory_space<vmem>> -> memref<8x8x128xf32, #tpu.memory_space<vmem>>
    %238 = arith.index_cast %235 : i32 to index
    %c0_84 = arith.constant 0 : index
    %c0_85 = arith.constant 0 : index
    %239 = vector.load %237[%238, %c0_84, %c0_85] : memref<8x8x128xf32, #tpu.memory_space<vmem>>, vector<1x8x128xf32>
    %240 = vector.shape_cast %239 : vector<1x8x128xf32> to vector<8x128xf32>
    %cst_86 = arith.constant dense<0.000000e+00> : vector<8x128xf32>
    %241 = tpu.matmul %195, %7, %cst_86 {dimension_numbers = #tpu.dot_dimension_numbers<[1], [0], [0], [1], [0, 0, 1, 1], [], []>} : vector<8x32xf32>, vector<32x128xf32>, vector<8x128xf32> -> vector<8x128xf32>
    %242 = arith.addf %240, %241 : vector<8x128xf32>
    %243 = arith.negf %242 : vector<8x128xf32>
    %244 = math.exp %243 : vector<8x128xf32>
    %cst_87 = arith.constant 1.000000e+00 : f32
    %245 = vector.broadcast %cst_87 : f32 to vector<8x128xf32>
    %246 = arith.addf %245, %244 : vector<8x128xf32>
    %247 = arith.divf %245, %246 : vector<8x128xf32>
    %248 = math.tanh %242 : vector<8x128xf32>
    %249 = vector.extract_strided_slice %247 {offsets = [0, 0], sizes = [8, 32], strides = [1, 1]} : vector<8x128xf32> to vector<8x32xf32>
    %250 = vector.extract_strided_slice %247 {offsets = [0, 32], sizes = [8, 32], strides = [1, 1]} : vector<8x128xf32> to vector<8x32xf32>
    %251 = vector.extract_strided_slice %248 {offsets = [0, 64], sizes = [8, 32], strides = [1, 1]} : vector<8x128xf32> to vector<8x32xf32>
    %252 = vector.extract_strided_slice %247 {offsets = [0, 96], sizes = [8, 32], strides = [1, 1]} : vector<8x128xf32> to vector<8x32xf32>
    %253 = arith.mulf %250, %196 : vector<8x32xf32>
    %254 = arith.mulf %249, %251 : vector<8x32xf32>
    %255 = arith.addf %253, %254 : vector<8x32xf32>
    %256 = math.tanh %255 : vector<8x32xf32>
    %257 = arith.mulf %252, %256 : vector<8x32xf32>
    %258 = vector.broadcast %235 : i32 to vector<8x32xi32>
    %259 = arith.cmpi sgt, %2, %258 : vector<8x32xi32>
    %260 = arith.select %259, %257, %195 : vector<8x32xi1>, vector<8x32xf32>
    %261 = arith.select %259, %255, %196 : vector<8x32xi1>, vector<8x32xf32>
    %cst_88 = arith.constant 0.000000e+00 : f32
    %262 = vector.broadcast %cst_88 : f32 to vector<8x32xf32>
    %263 = arith.select %259, %257, %262 : vector<8x32xi1>, vector<8x32xf32>
    %264 = arith.index_cast %235 : i32 to index
    %c0_89 = arith.constant 0 : index
    %c0_90 = arith.constant 0 : index
    %265 = vector.load %arg9[%264, %c0_89, %c0_90] : memref<8x8x32xf32, #tpu.memory_space<vmem>>, vector<1x8x32xf32>
    %266 = vector.shape_cast %265 : vector<1x8x32xf32> to vector<8x32xf32>
    %267 = vector.shape_cast %263 : vector<8x32xf32> to vector<1x8x32xf32>
    tpu.vector_store %arg9[%264, %c0_89, %c0_90], %267 {strides = array<i32>} : memref<8x8x32xf32, #tpu.memory_space<vmem>>, vector<1x8x32xf32>,
    %c4_i32 = arith.constant 4 : i32
    %c0_i32_91 = arith.constant 0 : i32
    %c0_i32_92 = arith.constant 0 : i32
    %c0_i32_93 = arith.constant 0 : i32
    %268 = tpu.memref_slice %arg1[%c0_i32, %c0_i32_91, %c0_i32_92, %c0_i32_93] : memref<2x8x8x128xf32, #tpu.memory_space<vmem>> -> memref<1x8x8x128xf32, #tpu.memory_space<vmem>>
    %269 = tpu.memref_squeeze %268 : memref<1x8x8x128xf32, #tpu.memory_space<vmem>> -> memref<8x8x128xf32, #tpu.memory_space<vmem>>
    %270 = arith.index_cast %c4_i32 : i32 to index
    %c0_94 = arith.constant 0 : index
    %c0_95 = arith.constant 0 : index
    %271 = vector.load %269[%270, %c0_94, %c0_95] : memref<8x8x128xf32, #tpu.memory_space<vmem>>, vector<1x8x128xf32>
    %272 = vector.shape_cast %271 : vector<1x8x128xf32> to vector<8x128xf32>
    %cst_96 = arith.constant dense<0.000000e+00> : vector<8x128xf32>
    %273 = tpu.matmul %227, %5, %cst_96 {dimension_numbers = #tpu.dot_dimension_numbers<[1], [0], [0], [1], [0, 0, 1, 1], [], []>} : vector<8x32xf32>, vector<32x128xf32>, vector<8x128xf32> -> vector<8x128xf32>
    %274 = arith.addf %272, %273 : vector<8x128xf32>
    %275 = arith.negf %274 : vector<8x128xf32>
    %276 = math.exp %275 : vector<8x128xf32>
    %cst_97 = arith.constant 1.000000e+00 : f32
    %277 = vector.broadcast %cst_97 : f32 to vector<8x128xf32>
    %278 = arith.addf %277, %276 : vector<8x128xf32>
    %279 = arith.divf %277, %278 : vector<8x128xf32>
    %280 = math.tanh %274 : vector<8x128xf32>
    %281 = vector.extract_strided_slice %279 {offsets = [0, 0], sizes = [8, 32], strides = [1, 1]} : vector<8x128xf32> to vector<8x32xf32>
    %282 = vector.extract_strided_slice %279 {offsets = [0, 32], sizes = [8, 32], strides = [1, 1]} : vector<8x128xf32> to vector<8x32xf32>
    %283 = vector.extract_strided_slice %280 {offsets = [0, 64], sizes = [8, 32], strides = [1, 1]} : vector<8x128xf32> to vector<8x32xf32>
    %284 = vector.extract_strided_slice %279 {offsets = [0, 96], sizes = [8, 32], strides = [1, 1]} : vector<8x128xf32> to vector<8x32xf32>
    %285 = arith.mulf %282, %228 : vector<8x32xf32>
    %286 = arith.mulf %281, %283 : vector<8x32xf32>
    %287 = arith.addf %285, %286 : vector<8x32xf32>
    %288 = math.tanh %287 : vector<8x32xf32>
    %289 = arith.mulf %284, %288 : vector<8x32xf32>
    %290 = vector.broadcast %c4_i32 : i32 to vector<8x32xi32>
    %291 = arith.cmpi sgt, %2, %290 : vector<8x32xi32>
    %292 = arith.select %291, %289, %227 : vector<8x32xi1>, vector<8x32xf32>
    %293 = arith.select %291, %287, %228 : vector<8x32xi1>, vector<8x32xf32>
    %cst_98 = arith.constant 0.000000e+00 : f32
    %294 = vector.broadcast %cst_98 : f32 to vector<8x32xf32>
    %295 = arith.select %291, %289, %294 : vector<8x32xi1>, vector<8x32xf32>
    %296 = arith.index_cast %c4_i32 : i32 to index
    %c0_99 = arith.constant 0 : index
    %c0_100 = arith.constant 0 : index
    %297 = vector.load %arg5[%296, %c0_99, %c0_100] : memref<8x8x32xf32, #tpu.memory_space<vmem>>, vector<1x8x32xf32>
    %298 = vector.shape_cast %297 : vector<1x8x32xf32> to vector<8x32xf32>
    %299 = vector.shape_cast %295 : vector<8x32xf32> to vector<1x8x32xf32>
    tpu.vector_store %arg5[%296, %c0_99, %c0_100], %299 {strides = array<i32>} : memref<8x8x32xf32, #tpu.memory_space<vmem>>, vector<1x8x32xf32>,
    %c7_i32_101 = arith.constant 7 : i32
    %300 = arith.subi %c7_i32_101, %c4_i32 : i32
    %c0_i32_102 = arith.constant 0 : i32
    %c0_i32_103 = arith.constant 0 : i32
    %c0_i32_104 = arith.constant 0 : i32
    %301 = tpu.memref_slice %arg1[%c1_i32, %c0_i32_102, %c0_i32_103, %c0_i32_104] : memref<2x8x8x128xf32, #tpu.memory_space<vmem>> -> memref<1x8x8x128xf32, #tpu.memory_space<vmem>>
    %302 = tpu.memref_squeeze %301 : memref<1x8x8x128xf32, #tpu.memory_space<vmem>> -> memref<8x8x128xf32, #tpu.memory_space<vmem>>
    %303 = arith.index_cast %300 : i32 to index
    %c0_105 = arith.constant 0 : index
    %c0_106 = arith.constant 0 : index
    %304 = vector.load %302[%303, %c0_105, %c0_106] : memref<8x8x128xf32, #tpu.memory_space<vmem>>, vector<1x8x128xf32>
    %305 = vector.shape_cast %304 : vector<1x8x128xf32> to vector<8x128xf32>
    %cst_107 = arith.constant dense<0.000000e+00> : vector<8x128xf32>
    %306 = tpu.matmul %260, %7, %cst_107 {dimension_numbers = #tpu.dot_dimension_numbers<[1], [0], [0], [1], [0, 0, 1, 1], [], []>} : vector<8x32xf32>, vector<32x128xf32>, vector<8x128xf32> -> vector<8x128xf32>
    %307 = arith.addf %305, %306 : vector<8x128xf32>
    %308 = arith.negf %307 : vector<8x128xf32>
    %309 = math.exp %308 : vector<8x128xf32>
    %cst_108 = arith.constant 1.000000e+00 : f32
    %310 = vector.broadcast %cst_108 : f32 to vector<8x128xf32>
    %311 = arith.addf %310, %309 : vector<8x128xf32>
    %312 = arith.divf %310, %311 : vector<8x128xf32>
    %313 = math.tanh %307 : vector<8x128xf32>
    %314 = vector.extract_strided_slice %312 {offsets = [0, 0], sizes = [8, 32], strides = [1, 1]} : vector<8x128xf32> to vector<8x32xf32>
    %315 = vector.extract_strided_slice %312 {offsets = [0, 32], sizes = [8, 32], strides = [1, 1]} : vector<8x128xf32> to vector<8x32xf32>
    %316 = vector.extract_strided_slice %313 {offsets = [0, 64], sizes = [8, 32], strides = [1, 1]} : vector<8x128xf32> to vector<8x32xf32>
    %317 = vector.extract_strided_slice %312 {offsets = [0, 96], sizes = [8, 32], strides = [1, 1]} : vector<8x128xf32> to vector<8x32xf32>
    %318 = arith.mulf %315, %261 : vector<8x32xf32>
    %319 = arith.mulf %314, %316 : vector<8x32xf32>
    %320 = arith.addf %318, %319 : vector<8x32xf32>
    %321 = math.tanh %320 : vector<8x32xf32>
    %322 = arith.mulf %317, %321 : vector<8x32xf32>
    %323 = vector.broadcast %300 : i32 to vector<8x32xi32>
    %324 = arith.cmpi sgt, %2, %323 : vector<8x32xi32>
    %325 = arith.select %324, %322, %260 : vector<8x32xi1>, vector<8x32xf32>
    %326 = arith.select %324, %320, %261 : vector<8x32xi1>, vector<8x32xf32>
    %cst_109 = arith.constant 0.000000e+00 : f32
    %327 = vector.broadcast %cst_109 : f32 to vector<8x32xf32>
    %328 = arith.select %324, %322, %327 : vector<8x32xi1>, vector<8x32xf32>
    %329 = arith.index_cast %300 : i32 to index
    %c0_110 = arith.constant 0 : index
    %c0_111 = arith.constant 0 : index
    %330 = vector.load %arg9[%329, %c0_110, %c0_111] : memref<8x8x32xf32, #tpu.memory_space<vmem>>, vector<1x8x32xf32>
    %331 = vector.shape_cast %330 : vector<1x8x32xf32> to vector<8x32xf32>
    %332 = vector.shape_cast %328 : vector<8x32xf32> to vector<1x8x32xf32>
    tpu.vector_store %arg9[%329, %c0_110, %c0_111], %332 {strides = array<i32>} : memref<8x8x32xf32, #tpu.memory_space<vmem>>, vector<1x8x32xf32>,
    %c5_i32 = arith.constant 5 : i32
    %c0_i32_112 = arith.constant 0 : i32
    %c0_i32_113 = arith.constant 0 : i32
    %c0_i32_114 = arith.constant 0 : i32
    %333 = tpu.memref_slice %arg1[%c0_i32, %c0_i32_112, %c0_i32_113, %c0_i32_114] : memref<2x8x8x128xf32, #tpu.memory_space<vmem>> -> memref<1x8x8x128xf32, #tpu.memory_space<vmem>>
    %334 = tpu.memref_squeeze %333 : memref<1x8x8x128xf32, #tpu.memory_space<vmem>> -> memref<8x8x128xf32, #tpu.memory_space<vmem>>
    %335 = arith.index_cast %c5_i32 : i32 to index
    %c0_115 = arith.constant 0 : index
    %c0_116 = arith.constant 0 : index
    %336 = vector.load %334[%335, %c0_115, %c0_116] : memref<8x8x128xf32, #tpu.memory_space<vmem>>, vector<1x8x128xf32>
    %337 = vector.shape_cast %336 : vector<1x8x128xf32> to vector<8x128xf32>
    %cst_117 = arith.constant dense<0.000000e+00> : vector<8x128xf32>
    %338 = tpu.matmul %292, %5, %cst_117 {dimension_numbers = #tpu.dot_dimension_numbers<[1], [0], [0], [1], [0, 0, 1, 1], [], []>} : vector<8x32xf32>, vector<32x128xf32>, vector<8x128xf32> -> vector<8x128xf32>
    %339 = arith.addf %337, %338 : vector<8x128xf32>
    %340 = arith.negf %339 : vector<8x128xf32>
    %341 = math.exp %340 : vector<8x128xf32>
    %cst_118 = arith.constant 1.000000e+00 : f32
    %342 = vector.broadcast %cst_118 : f32 to vector<8x128xf32>
    %343 = arith.addf %342, %341 : vector<8x128xf32>
    %344 = arith.divf %342, %343 : vector<8x128xf32>
    %345 = math.tanh %339 : vector<8x128xf32>
    %346 = vector.extract_strided_slice %344 {offsets = [0, 0], sizes = [8, 32], strides = [1, 1]} : vector<8x128xf32> to vector<8x32xf32>
    %347 = vector.extract_strided_slice %344 {offsets = [0, 32], sizes = [8, 32], strides = [1, 1]} : vector<8x128xf32> to vector<8x32xf32>
    %348 = vector.extract_strided_slice %345 {offsets = [0, 64], sizes = [8, 32], strides = [1, 1]} : vector<8x128xf32> to vector<8x32xf32>
    %349 = vector.extract_strided_slice %344 {offsets = [0, 96], sizes = [8, 32], strides = [1, 1]} : vector<8x128xf32> to vector<8x32xf32>
    %350 = arith.mulf %347, %293 : vector<8x32xf32>
    %351 = arith.mulf %346, %348 : vector<8x32xf32>
    %352 = arith.addf %350, %351 : vector<8x32xf32>
    %353 = math.tanh %352 : vector<8x32xf32>
    %354 = arith.mulf %349, %353 : vector<8x32xf32>
    %355 = vector.broadcast %c5_i32 : i32 to vector<8x32xi32>
    %356 = arith.cmpi sgt, %2, %355 : vector<8x32xi32>
    %357 = arith.select %356, %354, %292 : vector<8x32xi1>, vector<8x32xf32>
    %358 = arith.select %356, %352, %293 : vector<8x32xi1>, vector<8x32xf32>
    %cst_119 = arith.constant 0.000000e+00 : f32
    %359 = vector.broadcast %cst_119 : f32 to vector<8x32xf32>
    %360 = arith.select %356, %354, %359 : vector<8x32xi1>, vector<8x32xf32>
    %361 = arith.index_cast %c5_i32 : i32 to index
    %c0_120 = arith.constant 0 : index
    %c0_121 = arith.constant 0 : index
    %362 = vector.load %arg5[%361, %c0_120, %c0_121] : memref<8x8x32xf32, #tpu.memory_space<vmem>>, vector<1x8x32xf32>
    %363 = vector.shape_cast %362 : vector<1x8x32xf32> to vector<8x32xf32>
    %364 = vector.shape_cast %360 : vector<8x32xf32> to vector<1x8x32xf32>
    tpu.vector_store %arg5[%361, %c0_120, %c0_121], %364 {strides = array<i32>} : memref<8x8x32xf32, #tpu.memory_space<vmem>>, vector<1x8x32xf32>,
    %c7_i32_122 = arith.constant 7 : i32
    %365 = arith.subi %c7_i32_122, %c5_i32 : i32
    %c0_i32_123 = arith.constant 0 : i32
    %c0_i32_124 = arith.constant 0 : i32
    %c0_i32_125 = arith.constant 0 : i32
    %366 = tpu.memref_slice %arg1[%c1_i32, %c0_i32_123, %c0_i32_124, %c0_i32_125] : memref<2x8x8x128xf32, #tpu.memory_space<vmem>> -> memref<1x8x8x128xf32, #tpu.memory_space<vmem>>
    %367 = tpu.memref_squeeze %366 : memref<1x8x8x128xf32, #tpu.memory_space<vmem>> -> memref<8x8x128xf32, #tpu.memory_space<vmem>>
    %368 = arith.index_cast %365 : i32 to index
    %c0_126 = arith.constant 0 : index
    %c0_127 = arith.constant 0 : index
    %369 = vector.load %367[%368, %c0_126, %c0_127] : memref<8x8x128xf32, #tpu.memory_space<vmem>>, vector<1x8x128xf32>
    %370 = vector.shape_cast %369 : vector<1x8x128xf32> to vector<8x128xf32>
    %cst_128 = arith.constant dense<0.000000e+00> : vector<8x128xf32>
    %371 = tpu.matmul %325, %7, %cst_128 {dimension_numbers = #tpu.dot_dimension_numbers<[1], [0], [0], [1], [0, 0, 1, 1], [], []>} : vector<8x32xf32>, vector<32x128xf32>, vector<8x128xf32> -> vector<8x128xf32>
    %372 = arith.addf %370, %371 : vector<8x128xf32>
    %373 = arith.negf %372 : vector<8x128xf32>
    %374 = math.exp %373 : vector<8x128xf32>
    %cst_129 = arith.constant 1.000000e+00 : f32
    %375 = vector.broadcast %cst_129 : f32 to vector<8x128xf32>
    %376 = arith.addf %375, %374 : vector<8x128xf32>
    %377 = arith.divf %375, %376 : vector<8x128xf32>
    %378 = math.tanh %372 : vector<8x128xf32>
    %379 = vector.extract_strided_slice %377 {offsets = [0, 0], sizes = [8, 32], strides = [1, 1]} : vector<8x128xf32> to vector<8x32xf32>
    %380 = vector.extract_strided_slice %377 {offsets = [0, 32], sizes = [8, 32], strides = [1, 1]} : vector<8x128xf32> to vector<8x32xf32>
    %381 = vector.extract_strided_slice %378 {offsets = [0, 64], sizes = [8, 32], strides = [1, 1]} : vector<8x128xf32> to vector<8x32xf32>
    %382 = vector.extract_strided_slice %377 {offsets = [0, 96], sizes = [8, 32], strides = [1, 1]} : vector<8x128xf32> to vector<8x32xf32>
    %383 = arith.mulf %380, %326 : vector<8x32xf32>
    %384 = arith.mulf %379, %381 : vector<8x32xf32>
    %385 = arith.addf %383, %384 : vector<8x32xf32>
    %386 = math.tanh %385 : vector<8x32xf32>
    %387 = arith.mulf %382, %386 : vector<8x32xf32>
    %388 = vector.broadcast %365 : i32 to vector<8x32xi32>
    %389 = arith.cmpi sgt, %2, %388 : vector<8x32xi32>
    %390 = arith.select %389, %387, %325 : vector<8x32xi1>, vector<8x32xf32>
    %391 = arith.select %389, %385, %326 : vector<8x32xi1>, vector<8x32xf32>
    %cst_130 = arith.constant 0.000000e+00 : f32
    %392 = vector.broadcast %cst_130 : f32 to vector<8x32xf32>
    %393 = arith.select %389, %387, %392 : vector<8x32xi1>, vector<8x32xf32>
    %394 = arith.index_cast %365 : i32 to index
    %c0_131 = arith.constant 0 : index
    %c0_132 = arith.constant 0 : index
    %395 = vector.load %arg9[%394, %c0_131, %c0_132] : memref<8x8x32xf32, #tpu.memory_space<vmem>>, vector<1x8x32xf32>
    %396 = vector.shape_cast %395 : vector<1x8x32xf32> to vector<8x32xf32>
    %397 = vector.shape_cast %393 : vector<8x32xf32> to vector<1x8x32xf32>
    tpu.vector_store %arg9[%394, %c0_131, %c0_132], %397 {strides = array<i32>} : memref<8x8x32xf32, #tpu.memory_space<vmem>>, vector<1x8x32xf32>,
    %c6_i32 = arith.constant 6 : i32
    %c0_i32_133 = arith.constant 0 : i32
    %c0_i32_134 = arith.constant 0 : i32
    %c0_i32_135 = arith.constant 0 : i32
    %398 = tpu.memref_slice %arg1[%c0_i32, %c0_i32_133, %c0_i32_134, %c0_i32_135] : memref<2x8x8x128xf32, #tpu.memory_space<vmem>> -> memref<1x8x8x128xf32, #tpu.memory_space<vmem>>
    %399 = tpu.memref_squeeze %398 : memref<1x8x8x128xf32, #tpu.memory_space<vmem>> -> memref<8x8x128xf32, #tpu.memory_space<vmem>>
    %400 = arith.index_cast %c6_i32 : i32 to index
    %c0_136 = arith.constant 0 : index
    %c0_137 = arith.constant 0 : index
    %401 = vector.load %399[%400, %c0_136, %c0_137] : memref<8x8x128xf32, #tpu.memory_space<vmem>>, vector<1x8x128xf32>
    %402 = vector.shape_cast %401 : vector<1x8x128xf32> to vector<8x128xf32>
    %cst_138 = arith.constant dense<0.000000e+00> : vector<8x128xf32>
    %403 = tpu.matmul %357, %5, %cst_138 {dimension_numbers = #tpu.dot_dimension_numbers<[1], [0], [0], [1], [0, 0, 1, 1], [], []>} : vector<8x32xf32>, vector<32x128xf32>, vector<8x128xf32> -> vector<8x128xf32>
    %404 = arith.addf %402, %403 : vector<8x128xf32>
    %405 = arith.negf %404 : vector<8x128xf32>
    %406 = math.exp %405 : vector<8x128xf32>
    %cst_139 = arith.constant 1.000000e+00 : f32
    %407 = vector.broadcast %cst_139 : f32 to vector<8x128xf32>
    %408 = arith.addf %407, %406 : vector<8x128xf32>
    %409 = arith.divf %407, %408 : vector<8x128xf32>
    %410 = math.tanh %404 : vector<8x128xf32>
    %411 = vector.extract_strided_slice %409 {offsets = [0, 0], sizes = [8, 32], strides = [1, 1]} : vector<8x128xf32> to vector<8x32xf32>
    %412 = vector.extract_strided_slice %409 {offsets = [0, 32], sizes = [8, 32], strides = [1, 1]} : vector<8x128xf32> to vector<8x32xf32>
    %413 = vector.extract_strided_slice %410 {offsets = [0, 64], sizes = [8, 32], strides = [1, 1]} : vector<8x128xf32> to vector<8x32xf32>
    %414 = vector.extract_strided_slice %409 {offsets = [0, 96], sizes = [8, 32], strides = [1, 1]} : vector<8x128xf32> to vector<8x32xf32>
    %415 = arith.mulf %412, %358 : vector<8x32xf32>
    %416 = arith.mulf %411, %413 : vector<8x32xf32>
    %417 = arith.addf %415, %416 : vector<8x32xf32>
    %418 = math.tanh %417 : vector<8x32xf32>
    %419 = arith.mulf %414, %418 : vector<8x32xf32>
    %420 = vector.broadcast %c6_i32 : i32 to vector<8x32xi32>
    %421 = arith.cmpi sgt, %2, %420 : vector<8x32xi32>
    %422 = arith.select %421, %419, %357 : vector<8x32xi1>, vector<8x32xf32>
    %423 = arith.select %421, %417, %358 : vector<8x32xi1>, vector<8x32xf32>
    %cst_140 = arith.constant 0.000000e+00 : f32
    %424 = vector.broadcast %cst_140 : f32 to vector<8x32xf32>
    %425 = arith.select %421, %419, %424 : vector<8x32xi1>, vector<8x32xf32>
    %426 = arith.index_cast %c6_i32 : i32 to index
    %c0_141 = arith.constant 0 : index
    %c0_142 = arith.constant 0 : index
    %427 = vector.load %arg5[%426, %c0_141, %c0_142] : memref<8x8x32xf32, #tpu.memory_space<vmem>>, vector<1x8x32xf32>
    %428 = vector.shape_cast %427 : vector<1x8x32xf32> to vector<8x32xf32>
    %429 = vector.shape_cast %425 : vector<8x32xf32> to vector<1x8x32xf32>
    tpu.vector_store %arg5[%426, %c0_141, %c0_142], %429 {strides = array<i32>} : memref<8x8x32xf32, #tpu.memory_space<vmem>>, vector<1x8x32xf32>,
    %c7_i32_143 = arith.constant 7 : i32
    %430 = arith.subi %c7_i32_143, %c6_i32 : i32
    %c0_i32_144 = arith.constant 0 : i32
    %c0_i32_145 = arith.constant 0 : i32
    %c0_i32_146 = arith.constant 0 : i32
    %431 = tpu.memref_slice %arg1[%c1_i32, %c0_i32_144, %c0_i32_145, %c0_i32_146] : memref<2x8x8x128xf32, #tpu.memory_space<vmem>> -> memref<1x8x8x128xf32, #tpu.memory_space<vmem>>
    %432 = tpu.memref_squeeze %431 : memref<1x8x8x128xf32, #tpu.memory_space<vmem>> -> memref<8x8x128xf32, #tpu.memory_space<vmem>>
    %433 = arith.index_cast %430 : i32 to index
    %c0_147 = arith.constant 0 : index
    %c0_148 = arith.constant 0 : index
    %434 = vector.load %432[%433, %c0_147, %c0_148] : memref<8x8x128xf32, #tpu.memory_space<vmem>>, vector<1x8x128xf32>
    %435 = vector.shape_cast %434 : vector<1x8x128xf32> to vector<8x128xf32>
    %cst_149 = arith.constant dense<0.000000e+00> : vector<8x128xf32>
    %436 = tpu.matmul %390, %7, %cst_149 {dimension_numbers = #tpu.dot_dimension_numbers<[1], [0], [0], [1], [0, 0, 1, 1], [], []>} : vector<8x32xf32>, vector<32x128xf32>, vector<8x128xf32> -> vector<8x128xf32>
    %437 = arith.addf %435, %436 : vector<8x128xf32>
    %438 = arith.negf %437 : vector<8x128xf32>
    %439 = math.exp %438 : vector<8x128xf32>
    %cst_150 = arith.constant 1.000000e+00 : f32
    %440 = vector.broadcast %cst_150 : f32 to vector<8x128xf32>
    %441 = arith.addf %440, %439 : vector<8x128xf32>
    %442 = arith.divf %440, %441 : vector<8x128xf32>
    %443 = math.tanh %437 : vector<8x128xf32>
    %444 = vector.extract_strided_slice %442 {offsets = [0, 0], sizes = [8, 32], strides = [1, 1]} : vector<8x128xf32> to vector<8x32xf32>
    %445 = vector.extract_strided_slice %442 {offsets = [0, 32], sizes = [8, 32], strides = [1, 1]} : vector<8x128xf32> to vector<8x32xf32>
    %446 = vector.extract_strided_slice %443 {offsets = [0, 64], sizes = [8, 32], strides = [1, 1]} : vector<8x128xf32> to vector<8x32xf32>
    %447 = vector.extract_strided_slice %442 {offsets = [0, 96], sizes = [8, 32], strides = [1, 1]} : vector<8x128xf32> to vector<8x32xf32>
    %448 = arith.mulf %445, %391 : vector<8x32xf32>
    %449 = arith.mulf %444, %446 : vector<8x32xf32>
    %450 = arith.addf %448, %449 : vector<8x32xf32>
    %451 = math.tanh %450 : vector<8x32xf32>
    %452 = arith.mulf %447, %451 : vector<8x32xf32>
    %453 = vector.broadcast %430 : i32 to vector<8x32xi32>
    %454 = arith.cmpi sgt, %2, %453 : vector<8x32xi32>
    %455 = arith.select %454, %452, %390 : vector<8x32xi1>, vector<8x32xf32>
    %456 = arith.select %454, %450, %391 : vector<8x32xi1>, vector<8x32xf32>
    %cst_151 = arith.constant 0.000000e+00 : f32
    %457 = vector.broadcast %cst_151 : f32 to vector<8x32xf32>
    %458 = arith.select %454, %452, %457 : vector<8x32xi1>, vector<8x32xf32>
    %459 = arith.index_cast %430 : i32 to index
    %c0_152 = arith.constant 0 : index
    %c0_153 = arith.constant 0 : index
    %460 = vector.load %arg9[%459, %c0_152, %c0_153] : memref<8x8x32xf32, #tpu.memory_space<vmem>>, vector<1x8x32xf32>
    %461 = vector.shape_cast %460 : vector<1x8x32xf32> to vector<8x32xf32>
    %462 = vector.shape_cast %458 : vector<8x32xf32> to vector<1x8x32xf32>
    tpu.vector_store %arg9[%459, %c0_152, %c0_153], %462 {strides = array<i32>} : memref<8x8x32xf32, #tpu.memory_space<vmem>>, vector<1x8x32xf32>,
    %c7_i32_154 = arith.constant 7 : i32
    %c0_i32_155 = arith.constant 0 : i32
    %c0_i32_156 = arith.constant 0 : i32
    %c0_i32_157 = arith.constant 0 : i32
    %463 = tpu.memref_slice %arg1[%c0_i32, %c0_i32_155, %c0_i32_156, %c0_i32_157] : memref<2x8x8x128xf32, #tpu.memory_space<vmem>> -> memref<1x8x8x128xf32, #tpu.memory_space<vmem>>
    %464 = tpu.memref_squeeze %463 : memref<1x8x8x128xf32, #tpu.memory_space<vmem>> -> memref<8x8x128xf32, #tpu.memory_space<vmem>>
    %465 = arith.index_cast %c7_i32_154 : i32 to index
    %c0_158 = arith.constant 0 : index
    %c0_159 = arith.constant 0 : index
    %466 = vector.load %464[%465, %c0_158, %c0_159] : memref<8x8x128xf32, #tpu.memory_space<vmem>>, vector<1x8x128xf32>
    %467 = vector.shape_cast %466 : vector<1x8x128xf32> to vector<8x128xf32>
    %cst_160 = arith.constant dense<0.000000e+00> : vector<8x128xf32>
    %468 = tpu.matmul %422, %5, %cst_160 {dimension_numbers = #tpu.dot_dimension_numbers<[1], [0], [0], [1], [0, 0, 1, 1], [], []>} : vector<8x32xf32>, vector<32x128xf32>, vector<8x128xf32> -> vector<8x128xf32>
    %469 = arith.addf %467, %468 : vector<8x128xf32>
    %470 = arith.negf %469 : vector<8x128xf32>
    %471 = math.exp %470 : vector<8x128xf32>
    %cst_161 = arith.constant 1.000000e+00 : f32
    %472 = vector.broadcast %cst_161 : f32 to vector<8x128xf32>
    %473 = arith.addf %472, %471 : vector<8x128xf32>
    %474 = arith.divf %472, %473 : vector<8x128xf32>
    %475 = math.tanh %469 : vector<8x128xf32>
    %476 = vector.extract_strided_slice %474 {offsets = [0, 0], sizes = [8, 32], strides = [1, 1]} : vector<8x128xf32> to vector<8x32xf32>
    %477 = vector.extract_strided_slice %474 {offsets = [0, 32], sizes = [8, 32], strides = [1, 1]} : vector<8x128xf32> to vector<8x32xf32>
    %478 = vector.extract_strided_slice %475 {offsets = [0, 64], sizes = [8, 32], strides = [1, 1]} : vector<8x128xf32> to vector<8x32xf32>
    %479 = vector.extract_strided_slice %474 {offsets = [0, 96], sizes = [8, 32], strides = [1, 1]} : vector<8x128xf32> to vector<8x32xf32>
    %480 = arith.mulf %477, %423 : vector<8x32xf32>
    %481 = arith.mulf %476, %478 : vector<8x32xf32>
    %482 = arith.addf %480, %481 : vector<8x32xf32>
    %483 = math.tanh %482 : vector<8x32xf32>
    %484 = arith.mulf %479, %483 : vector<8x32xf32>
    %485 = vector.broadcast %c7_i32_154 : i32 to vector<8x32xi32>
    %486 = arith.cmpi sgt, %2, %485 : vector<8x32xi32>
    %487 = arith.select %486, %484, %422 : vector<8x32xi1>, vector<8x32xf32>
    %488 = arith.select %486, %482, %423 : vector<8x32xi1>, vector<8x32xf32>
    %cst_162 = arith.constant 0.000000e+00 : f32
    %489 = vector.broadcast %cst_162 : f32 to vector<8x32xf32>
    %490 = arith.select %486, %484, %489 : vector<8x32xi1>, vector<8x32xf32>
    %491 = arith.index_cast %c7_i32_154 : i32 to index
    %c0_163 = arith.constant 0 : index
    %c0_164 = arith.constant 0 : index
    %492 = vector.load %arg5[%491, %c0_163, %c0_164] : memref<8x8x32xf32, #tpu.memory_space<vmem>>, vector<1x8x32xf32>
    %493 = vector.shape_cast %492 : vector<1x8x32xf32> to vector<8x32xf32>
    %494 = vector.shape_cast %490 : vector<8x32xf32> to vector<1x8x32xf32>
    tpu.vector_store %arg5[%491, %c0_163, %c0_164], %494 {strides = array<i32>} : memref<8x8x32xf32, #tpu.memory_space<vmem>>, vector<1x8x32xf32>,
    %c7_i32_165 = arith.constant 7 : i32
    %495 = arith.subi %c7_i32_165, %c7_i32_154 : i32
    %c0_i32_166 = arith.constant 0 : i32
    %c0_i32_167 = arith.constant 0 : i32
    %c0_i32_168 = arith.constant 0 : i32
    %496 = tpu.memref_slice %arg1[%c1_i32, %c0_i32_166, %c0_i32_167, %c0_i32_168] : memref<2x8x8x128xf32, #tpu.memory_space<vmem>> -> memref<1x8x8x128xf32, #tpu.memory_space<vmem>>
    %497 = tpu.memref_squeeze %496 : memref<1x8x8x128xf32, #tpu.memory_space<vmem>> -> memref<8x8x128xf32, #tpu.memory_space<vmem>>
    %498 = arith.index_cast %495 : i32 to index
    %c0_169 = arith.constant 0 : index
    %c0_170 = arith.constant 0 : index
    %499 = vector.load %497[%498, %c0_169, %c0_170] : memref<8x8x128xf32, #tpu.memory_space<vmem>>, vector<1x8x128xf32>
    %500 = vector.shape_cast %499 : vector<1x8x128xf32> to vector<8x128xf32>
    %cst_171 = arith.constant dense<0.000000e+00> : vector<8x128xf32>
    %501 = tpu.matmul %455, %7, %cst_171 {dimension_numbers = #tpu.dot_dimension_numbers<[1], [0], [0], [1], [0, 0, 1, 1], [], []>} : vector<8x32xf32>, vector<32x128xf32>, vector<8x128xf32> -> vector<8x128xf32>
    %502 = arith.addf %500, %501 : vector<8x128xf32>
    %503 = arith.negf %502 : vector<8x128xf32>
    %504 = math.exp %503 : vector<8x128xf32>
    %cst_172 = arith.constant 1.000000e+00 : f32
    %505 = vector.broadcast %cst_172 : f32 to vector<8x128xf32>
    %506 = arith.addf %505, %504 : vector<8x128xf32>
    %507 = arith.divf %505, %506 : vector<8x128xf32>
    %508 = math.tanh %502 : vector<8x128xf32>
    %509 = vector.extract_strided_slice %507 {offsets = [0, 0], sizes = [8, 32], strides = [1, 1]} : vector<8x128xf32> to vector<8x32xf32>
    %510 = vector.extract_strided_slice %507 {offsets = [0, 32], sizes = [8, 32], strides = [1, 1]} : vector<8x128xf32> to vector<8x32xf32>
    %511 = vector.extract_strided_slice %508 {offsets = [0, 64], sizes = [8, 32], strides = [1, 1]} : vector<8x128xf32> to vector<8x32xf32>
    %512 = vector.extract_strided_slice %507 {offsets = [0, 96], sizes = [8, 32], strides = [1, 1]} : vector<8x128xf32> to vector<8x32xf32>
    %513 = arith.mulf %510, %456 : vector<8x32xf32>
    %514 = arith.mulf %509, %511 : vector<8x32xf32>
    %515 = arith.addf %513, %514 : vector<8x32xf32>
    %516 = math.tanh %515 : vector<8x32xf32>
    %517 = arith.mulf %512, %516 : vector<8x32xf32>
    %518 = vector.broadcast %495 : i32 to vector<8x32xi32>
    %519 = arith.cmpi sgt, %2, %518 : vector<8x32xi32>
    %520 = arith.select %519, %517, %455 : vector<8x32xi1>, vector<8x32xf32>
    %521 = arith.select %519, %515, %456 : vector<8x32xi1>, vector<8x32xf32>
    %cst_173 = arith.constant 0.000000e+00 : f32
    %522 = vector.broadcast %cst_173 : f32 to vector<8x32xf32>
    %523 = arith.select %519, %517, %522 : vector<8x32xi1>, vector<8x32xf32>
    %524 = arith.index_cast %495 : i32 to index
    %c0_174 = arith.constant 0 : index
    %c0_175 = arith.constant 0 : index
    %525 = vector.load %arg9[%524, %c0_174, %c0_175] : memref<8x8x32xf32, #tpu.memory_space<vmem>>, vector<1x8x32xf32>
    %526 = vector.shape_cast %525 : vector<1x8x32xf32> to vector<8x32xf32>
    %527 = vector.shape_cast %523 : vector<8x32xf32> to vector<1x8x32xf32>
    tpu.vector_store %arg9[%524, %c0_174, %c0_175], %527 {strides = array<i32>} : memref<8x8x32xf32, #tpu.memory_space<vmem>>, vector<1x8x32xf32>,
    %c8_i32 = arith.constant 8 : i32
    %528 = arith.addf %487, %520 : vector<8x32xf32>
    %c0_176 = arith.constant 0 : index
    %c0_177 = arith.constant 0 : index
    %529 = vector.load %arg7[%c0_176, %c0_177] : memref<8x32xf32, #tpu.memory_space<vmem>>, vector<8x32xf32>
    tpu.vector_store %arg7[%c0_176, %c0_177], %528 {strides = array<i32>} : memref<8x32xf32, #tpu.memory_space<vmem>>, vector<8x32xf32>,
    %530 = arith.addf %488, %521 : vector<8x32xf32>
    %c0_178 = arith.constant 0 : index
    %c0_179 = arith.constant 0 : index
    %531 = vector.load %arg8[%c0_178, %c0_179] : memref<8x32xf32, #tpu.memory_space<vmem>>, vector<8x32xf32>
    tpu.vector_store %arg8[%c0_178, %c0_179], %530 {strides = array<i32>} : memref<8x32xf32, #tpu.memory_space<vmem>>, vector<8x32xf32>,
    %c0_180 = arith.constant 0 : index
    %c0_181 = arith.constant 0 : index
    %c0_182 = arith.constant 0 : index
    %532 = vector.load %arg5[%c0_180, %c0_181, %c0_182] : memref<8x8x32xf32, #tpu.memory_space<vmem>>, vector<8x8x32xf32>
    %c0_183 = arith.constant 0 : index
    %c0_184 = arith.constant 0 : index
    %c0_185 = arith.constant 0 : index
    %533 = vector.load %arg9[%c0_183, %c0_184, %c0_185] : memref<8x8x32xf32, #tpu.memory_space<vmem>>, vector<8x8x32xf32>
    %534 = arith.addf %532, %533 : vector<8x8x32xf32>
    %c0_186 = arith.constant 0 : index
    %c0_187 = arith.constant 0 : index
    %c0_188 = arith.constant 0 : index
    %535 = vector.load %arg5[%c0_186, %c0_187, %c0_188] : memref<8x8x32xf32, #tpu.memory_space<vmem>>, vector<8x8x32xf32>
    tpu.vector_store %arg5[%c0_186, %c0_187, %c0_188], %534 {strides = array<i32>} : memref<8x8x32xf32, #tpu.memory_space<vmem>>, vector<8x8x32xf32>,
    %536 = vector.shape_cast %534 : vector<8x8x32xf32> to vector<64x32xf32>
    %c0_189 = arith.constant 0 : index
    %c0_190 = arith.constant 0 : index
    %537 = vector.load %arg3[%c0_189, %c0_190] : memref<32x32xf32, #tpu.memory_space<vmem>>, vector<32x32xf32>
    %cst_191 = arith.constant dense<0.000000e+00> : vector<64x32xf32>
    %538 = tpu.matmul %536, %537, %cst_191 {dimension_numbers = #tpu.dot_dimension_numbers<[1], [0], [0], [1], [0, 0, 1, 1], [], []>} : vector<64x32xf32>, vector<32x32xf32>, vector<64x32xf32> -> vector<64x32xf32>
    %c0_192 = arith.constant 0 : index
    %c0_193 = arith.constant 0 : index
    %539 = vector.load %arg4[%c0_192, %c0_193] : memref<1x32xf32, #tpu.memory_space<vmem>>, vector<1x32xf32>
    %540 = vector.broadcast %539 : vector<1x32xf32> to vector<64x32xf32>
    %541 = arith.addf %538, %540 : vector<64x32xf32>
    %542 = vector.shape_cast %541 : vector<64x32xf32> to vector<8x8x32xf32>
    %c0_194 = arith.constant 0 : index
    %c0_195 = arith.constant 0 : index
    %c0_196 = arith.constant 0 : index
    %543 = vector.load %arg6[%c0_194, %c0_195, %c0_196] : memref<8x8x32xf32, #tpu.memory_space<vmem>>, vector<8x8x32xf32>
    tpu.vector_store %arg6[%c0_194, %c0_195, %c0_196], %542 {strides = array<i32>} : memref<8x8x32xf32, #tpu.memory_space<vmem>>, vector<8x8x32xf32>,
    return
  }
}

</mosaic_0001>

<llo_original>
// kernel: encoder_forward.1
$region0: #{encoder_forward.1}
  #allocation0 [shape = 'u32[]', space=smem, size = 0x4, offset = 0x4, fixed_abs, tag = 'smem constant byte address 0x4 - core index']
  #allocation1 [shape = 'u32[144,128]{1,0:T(1,128)}', space=vmem, size = 0x12000, scoped, tag = 'internal scratch']
  #allocation2 [shape = 'f32[8,8,32]{2,1,0:T(8,128)}', space=vmem, size = 0x8000, scoped, tag = 'scratch operand']
  %s0 = inlined_call_operand.vmem [shape: s32[8,1], index: 0, kind: input, shape index: {}]
  %s1 = inlined_call_operand.vmem [shape: f32[2,8,8,128], index: 1, kind: input, shape index: {}]
  %s2 = inlined_call_operand.vmem [shape: f32[2,32,128], index: 2, kind: input, shape index: {}]
  %s3 = inlined_call_operand.vmem [shape: f32[32,32], index: 3, kind: input, shape index: {}]
  %s4 = inlined_call_operand.vmem [shape: f32[1,32], index: 4, kind: input, shape index: {}]
  %s5 = inlined_call_operand.vmem [shape: f32[8,8,32], index: 5, kind: output, shape index: {0}]
  %s6 = inlined_call_operand.vmem [shape: f32[8,8,32], index: 6, kind: output, shape index: {1}]
  %s7 = inlined_call_operand.vmem [shape: f32[8,32], index: 7, kind: output, shape index: {2}]
  %s8 = inlined_call_operand.vmem [shape: f32[8,32], index: 8, kind: output, shape index: {3}]
  %9 = xla_tuple %s5, %s6, %s7, %s8
  %s10 = sld [smem:[#allocation0]]
  $region54: #{encoder_forward.1} parent=0
    _
  %s12 = ssub.s32 1, %s10
  %s13 = scalar_select 0, %s12, %s10
  // Predicated region
  $region2: #{encoder_forward.1} parent=0 // pred_check
    _
  $region3: #{encoder_forward.1} parent=0 // pred_check_branch
    %15 = sbr.rel (0) target = $region5
  $region4: #{encoder_forward.1} parent=0 // pred_region
    _
  $region5: #{encoder_forward.1} parent=0 // pred_fallthru
    _
  // Predicated region
  $region6: #{encoder_forward.1} parent=0 // pred_check
    _
  $region7: #{encoder_forward.1} parent=0 // pred_check_branch
    %17 = sbr.rel (0) target = $region9
  $region8: #{encoder_forward.1} parent=0 // pred_region
    _
  $region9: #{encoder_forward.1} parent=0 // pred_fallthru
    _
  // Predicated region
  $region10: #{encoder_forward.1} parent=0 // pred_check
    _
  $region11: #{encoder_forward.1} parent=0 // pred_check_branch
    %19 = sbr.rel (0) target = $region13
  $region12: #{encoder_forward.1} parent=0 // pred_region
    _
  $region13: #{encoder_forward.1} parent=0 // pred_fallthru
    _
  // Predicated region
  $region14: #{encoder_forward.1} parent=0 // pred_check
    _
  $region15: #{encoder_forward.1} parent=0 // pred_check_branch
    %21 = sbr.rel (0) target = $region17
  $region16: #{encoder_forward.1} parent=0 // pred_region
    _
  $region17: #{encoder_forward.1} parent=0 // pred_fallthru
    _
  // Predicated region
  $region18: #{encoder_forward.1} parent=0 // pred_check
    _
  $region19: #{encoder_forward.1} parent=0 // pred_check_branch
    %23 = sbr.rel (0) target = $region21
  $region20: #{encoder_forward.1} parent=0 // pred_region
    _
  $region21: #{encoder_forward.1} parent=0 // pred_fallthru
    _
  %v24 = vld [vmem:[%s0] sm:$0xff]
  %25 = vset.pattern.permute.xlu0 0
  %26 = vperm.xlu0 %25, %v24
  %v27 = vpop.permute.xlu0 %26
  %v28 = vld [vmem:[%s2] sm:$0xff]
  %v29 = vld [vmem:[%s2 + $0x8] sm:$0xff]
  %v30 = vld [vmem:[%s2 + $0x10] sm:$0xff]
  %v31 = vld [vmem:[%s2 + $0x18] sm:$0xff]
  %s32 = scalar_lea.vmem %s2, 32
  %v33 = vld [vmem:[%s32] sm:$0xff]
  %v34 = vld [vmem:[%s32 + $0x8] sm:$0xff]
  %v35 = vld [vmem:[%s32 + $0x10] sm:$0xff]
  %v36 = vld [vmem:[%s32 + $0x18] sm:$0xff]
  %v37 = vld [vmem:[%s1] sm:$0xff]
  %vm38 = vcmask 261120
  %v40 = vsel %vm38, 0.0, 0
  %42 = vmatprep.subr.mxu0 0.0
  %43 = vmatpush1.msra.mxu0 %v28
  %44 = vmatprep.subr.mxu0 0.0
  %45 = vmatpush1.msra.mxu0 %v29
  %46 = vmatprep.subr.mxu0 0.0
  %47 = vmatpush1.msra.mxu0 %v30
  %48 = vmatprep.subr.mxu0 0.0
  %49 = vmatpush1.msra.mxu0 %v31
  %50 = vmatprep.subr.mxu0 0.0
  %51 = vmatpush1.msra.mxu0 0.0
  %52 = vmatprep.subr.mxu0 0.0
  %53 = vmatpush1.msra.mxu0 0.0
  %54 = vmatprep.subr.mxu0 0.0
  %55 = vmatpush1.msra.mxu0 0.0
  %56 = vmatprep.subr.mxu0 0.0
  %57 = vmatpush1.msra.mxu0 0.0
  %58 = vmatprep.subr.mxu0 0.0
  %59 = vmatpush1.msra.mxu0 0.0
  %60 = vmatprep.subr.mxu0 0.0
  %61 = vmatpush1.msra.mxu0 0.0
  %62 = vmatprep.subr.mxu0 0.0
  %63 = vmatpush1.msra.mxu0 0.0
  %64 = vmatprep.subr.mxu0 0.0
  %65 = vmatpush1.msra.mxu0 0.0
  %66 = vmatprep.subr.mxu0 0.0
  %67 = vmatpush1.msra.mxu0 0.0
  %68 = vmatprep.subr.mxu0 0.0
  %69 = vmatpush1.msra.mxu0 0.0
  %70 = vmatprep.subr.mxu0 0.0
  %71 = vmatpush1.msra.mxu0 0.0
  %72 = vmatprep.subr.mxu0 0.0
  %73 = vmatpush1.msra.mxu0 0.0
  %74 = vmatprep.subr.mxu0 0.0
  %75 = vmatpush1.msra.mxu0 0.0
  %76 = vmatprep.subr.mxu0 0.0
  %77 = vmatpush1.msra.mxu0 0.0
  %78 = vmatprep.subr.mxu0 0.0
  %79 = vmatpush1.msra.mxu0 0.0
  %80 = vmatprep.subr.mxu0 0.0
  %81 = vmatpush1.msra.mxu0 0.0
  %82 = vmatprep.subr.mxu0 0.0
  %83 = vmatpush1.msra.mxu0 0.0
  %84 = vmatprep.subr.mxu0 0.0
  %85 = vmatpush1.msra.mxu0 0.0
  %86 = vmatprep.subr.mxu0 0.0
  %87 = vmatpush1.msra.mxu0 0.0
  %88 = vmatprep.subr.mxu0 0.0
  %89 = vmatpush1.msra.mxu0 0.0
  %90 = vmatprep.subr.mxu0 0.0
  %91 = vmatpush1.msra.mxu0 0.0
  %92 = vmatprep.subr.mxu0 0.0
  %93 = vmatpush1.msra.mxu0 0.0
  %94 = vmatprep.subr.mxu0 0.0
  %95 = vmatpush1.msra.mxu0 0.0
  %96 = vmatprep.subr.mxu0 0.0
  %97 = vmatpush1.msra.mxu0 0.0
  %98 = vmatprep.subr.mxu0 0.0
  %99 = vmatpush1.msra.mxu0 0.0
  %100 = vmatprep.subr.mxu0 0.0
  %101 = vmatpush1.msra.mxu0 0.0
  %102 = vmatprep.subr.mxu0 0.0
  %103 = vmatpush1.msra.mxu0 0.0
  %104 = vmatprep.subr.mxu0 0.0
  %105 = vmatpush1.msra.mxu0 0.0
  %106 = vmatprep.mubr.f32.mxu0 0.0
  %107 = vmatmul.mubr.f32.gmra.mrb[0].mxu0 %v40
  %v108 = vpop.f32.mrb[0].mxu0
  %v109 = vadd.f32 0.0, %v108
  %v110 = vpop.f32.mrb[0].mxu0
  %111 = vdwg.mxu0
  %v112 = vadd.f32 %v37, %v109
  %v113 = vxor.u32 %v112, 2147483648
  %v114 = vmul.f32 %v113, 1.442695
  %v115 = vpow.pop %v114
  %v116 = vadd.f32 %v115, 1.0
  %v117 = vrcp.pop %v116
  %v118 = vmul.f32 1.0, %v117
  %v119 = vtanh.pop %v112
  %v120 = vmul.f32 %v118, 0.0
  %122 = vrot.lane.b32.xlu0 %v119, 64
  %v123 = vpop.permute.xlu0 %122
  %v125 = vmul.f32 %v118, %v123
  %127 = vrot.lane.b32.xlu0 %v125, 32
  %v128 = vpop.permute.xlu0 %127
  %v130 = vadd.f32 %v120, %v128
  %v131 = vtanh.pop %v130
  %133 = vrot.lane.b32.xlu0 %v131, 64
  %v134 = vpop.permute.xlu0 %133
  %v136 = vmul.f32 %v118, %v134
  %vm137 = vcmp.gt.s32.totalorder %v27, 0
  %v138 = vsel %vm137, %v136, 0.0
  %v139 = vsel %vm137, %v130, 0.0
  %141 = vrot.lane.b32.xlu0 %v138, 32
  %v142 = vpop.permute.xlu0 %141
  %144 = vst.msk [vmem:[%s5] sm:$0xff] %vm38, %v142
  %s145 = scalar_lea.vmem %s1, 64
  %s146 = scalar_lea.vmem %s145, 56
  %v147 = vld [vmem:[%s146] sm:$0xff]
  %148 = vmatprep.subr.mxu0 0.0
  %149 = vmatpush1.msra.mxu0 %v33
  %150 = vmatprep.subr.mxu0 0.0
  %151 = vmatpush1.msra.mxu0 %v34
  %152 = vmatprep.subr.mxu0 0.0
  %153 = vmatpush1.msra.mxu0 %v35
  %154 = vmatprep.subr.mxu0 0.0
  %155 = vmatpush1.msra.mxu0 %v36
  %156 = vmatprep.subr.mxu0 0.0
  %157 = vmatpush1.msra.mxu0 0.0
  %158 = vmatprep.subr.mxu0 0.0
  %159 = vmatpush1.msra.mxu0 0.0
  %160 = vmatprep.subr.mxu0 0.0
  %161 = vmatpush1.msra.mxu0 0.0
  %162 = vmatprep.subr.mxu0 0.0
  %163 = vmatpush1.msra.mxu0 0.0
  %164 = vmatprep.subr.mxu0 0.0
  %165 = vmatpush1.msra.mxu0 0.0
  %166 = vmatprep.subr.mxu0 0.0
  %167 = vmatpush1.msra.mxu0 0.0
  %168 = vmatprep.subr.mxu0 0.0
  %169 = vmatpush1.msra.mxu0 0.0
  %170 = vmatprep.subr.mxu0 0.0
  %171 = vmatpush1.msra.mxu0 0.0
  %172 = vmatprep.subr.mxu0 0.0
  %173 = vmatpush1.msra.mxu0 0.0
  %174 = vmatprep.subr.mxu0 0.0
  %175 = vmatpush1.msra.mxu0 0.0
  %176 = vmatprep.subr.mxu0 0.0
  %177 = vmatpush1.msra.mxu0 0.0
  %178 = vmatprep.subr.mxu0 0.0
  %179 = vmatpush1.msra.mxu0 0.0
  %180 = vmatprep.subr.mxu0 0.0
  %181 = vmatpush1.msra.mxu0 0.0
  %182 = vmatprep.subr.mxu0 0.0
  %183 = vmatpush1.msra.mxu0 0.0
  %184 = vmatprep.subr.mxu0 0.0
  %185 = vmatpush1.msra.mxu0 0.0
  %186 = vmatprep.subr.mxu0 0.0
  %187 = vmatpush1.msra.mxu0 0.0
  %188 = vmatprep.subr.mxu0 0.0
  %189 = vmatpush1.msra.mxu0 0.0
  %190 = vmatprep.subr.mxu0 0.0
  %191 = vmatpush1.msra.mxu0 0.0
  %192 = vmatprep.subr.mxu0 0.0
  %193 = vmatpush1.msra.mxu0 0.0
  %194 = vmatprep.subr.mxu0 0.0
  %195 = vmatpush1.msra.mxu0 0.0
  %196 = vmatprep.subr.mxu0 0.0
  %197 = vmatpush1.msra.mxu0 0.0
  %198 = vmatprep.subr.mxu0 0.0
  %199 = vmatpush1.msra.mxu0 0.0
  %200 = vmatprep.subr.mxu0 0.0
  %201 = vmatpush1.msra.mxu0 0.0
  %202 = vmatprep.subr.mxu0 0.0
  %203 = vmatpush1.msra.mxu0 0.0
  %204 = vmatprep.subr.mxu0 0.0
  %205 = vmatpush1.msra.mxu0 0.0
  %206 = vmatprep.subr.mxu0 0.0
  %207 = vmatpush1.msra.mxu0 0.0
  %208 = vmatprep.subr.mxu0 0.0
  %209 = vmatpush1.msra.mxu0 0.0
  %210 = vmatprep.subr.mxu0 0.0
  %211 = vmatpush1.msra.mxu0 0.0
  %212 = vmatprep.mubr.f32.mxu0 0.0
  %213 = vmatmul.mubr.f32.gmra.mrb[0].mxu0 %v40
  %v214 = vpop.f32.mrb[0].mxu0
  %v215 = vadd.f32 0.0, %v214
  %v216 = vpop.f32.mrb[0].mxu0
  %217 = vdwg.mxu0
  %v218 = vadd.f32 %v147, %v215
  %v219 = vxor.u32 %v218, 2147483648
  %v220 = vmul.f32 %v219, 1.442695
  %v221 = vpow.pop %v220
  %v222 = vadd.f32 %v221, 1.0
  %v223 = vrcp.pop %v222
  %v224 = vmul.f32 1.0, %v223
  %v225 = vtanh.pop %v218
  %v226 = vmul.f32 %v224, 0.0
  %228 = vrot.lane.b32.xlu0 %v225, 64
  %v229 = vpop.permute.xlu0 %228
  %v231 = vmul.f32 %v224, %v229
  %233 = vrot.lane.b32.xlu0 %v231, 32
  %v234 = vpop.permute.xlu0 %233
  %v236 = vadd.f32 %v226, %v234
  %v237 = vtanh.pop %v236
  %239 = vrot.lane.b32.xlu0 %v237, 64
  %v240 = vpop.permute.xlu0 %239
  %v242 = vmul.f32 %v224, %v240
  %vm243 = vcmp.gt.s32.totalorder %v27, 7
  %v244 = vsel %vm243, %v242, 0.0
  %v245 = vsel %vm243, %v236, 0.0
  %247 = vrot.lane.b32.xlu0 %v244, 32
  %v248 = vpop.permute.xlu0 %247
  %s250 = scalar_lea.vmem [#allocation2], 56
  %251 = vst.msk [vmem:[%s250] sm:$0xff] %vm38, %v248
  %s252 = scalar_lea.vmem %s1, 8
  %v253 = vld [vmem:[%s252] sm:$0xff]
  %v254 = vsel %vm38, %v142, 0
  %256 = vmatprep.subr.mxu0 0.0
  %257 = vmatpush1.msra.mxu0 %v28
  %258 = vmatprep.subr.mxu0 0.0
  %259 = vmatpush1.msra.mxu0 %v29
  %260 = vmatprep.subr.mxu0 0.0
  %261 = vmatpush1.msra.mxu0 %v30
  %262 = vmatprep.subr.mxu0 0.0
  %263 = vmatpush1.msra.mxu0 %v31
  %264 = vmatprep.subr.mxu0 0.0
  %265 = vmatpush1.msra.mxu0 0.0
  %266 = vmatprep.subr.mxu0 0.0
  %267 = vmatpush1.msra.mxu0 0.0
  %268 = vmatprep.subr.mxu0 0.0
  %269 = vmatpush1.msra.mxu0 0.0
  %270 = vmatprep.subr.mxu0 0.0
  %271 = vmatpush1.msra.mxu0 0.0
  %272 = vmatprep.subr.mxu0 0.0
  %273 = vmatpush1.msra.mxu0 0.0
  %274 = vmatprep.subr.mxu0 0.0
  %275 = vmatpush1.msra.mxu0 0.0
  %276 = vmatprep.subr.mxu0 0.0
  %277 = vmatpush1.msra.mxu0 0.0
  %278 = vmatprep.subr.mxu0 0.0
  %279 = vmatpush1.msra.mxu0 0.0
  %280 = vmatprep.subr.mxu0 0.0
  %281 = vmatpush1.msra.mxu0 0.0
  %282 = vmatprep.subr.mxu0 0.0
  %283 = vmatpush1.msra.mxu0 0.0
  %284 = vmatprep.subr.mxu0 0.0
  %285 = vmatpush1.msra.mxu0 0.0
  %286 = vmatprep.subr.mxu0 0.0
  %287 = vmatpush1.msra.mxu0 0.0
  %288 = vmatprep.subr.mxu0 0.0
  %289 = vmatpush1.msra.mxu0 0.0
  %290 = vmatprep.subr.mxu0 0.0
  %291 = vmatpush1.msra.mxu0 0.0
  %292 = vmatprep.subr.mxu0 0.0
  %293 = vmatpush1.msra.mxu0 0.0
  %294 = vmatprep.subr.mxu0 0.0
  %295 = vmatpush1.msra.mxu0 0.0
  %296 = vmatprep.subr.mxu0 0.0
  %297 = vmatpush1.msra.mxu0 0.0
  %298 = vmatprep.subr.mxu0 0.0
  %299 = vmatpush1.msra.mxu0 0.0
  %300 = vmatprep.subr.mxu0 0.0
  %301 = vmatpush1.msra.mxu0 0.0
  %302 = vmatprep.subr.mxu0 0.0
  %303 = vmatpush1.msra.mxu0 0.0
  %304 = vmatprep.subr.mxu0 0.0
  %305 = vmatpush1.msra.mxu0 0.0
  %306 = vmatprep.subr.mxu0 0.0
  %307 = vmatpush1.msra.mxu0 0.0
  %308 = vmatprep.subr.mxu0 0.0
  %309 = vmatpush1.msra.mxu0 0.0
  %310 = vmatprep.subr.mxu0 0.0
  %311 = vmatpush1.msra.mxu0 0.0
  %312 = vmatprep.subr.mxu0 0.0
  %313 = vmatpush1.msra.mxu0 0.0
  %314 = vmatprep.subr.mxu0 0.0
  %315 = vmatpush1.msra.mxu0 0.0
  %316 = vmatprep.subr.mxu0 0.0
  %317 = vmatpush1.msra.mxu0 0.0
  %318 = vmatprep.subr.mxu0 0.0
  %319 = vmatpush1.msra.mxu0 0.0
  %320 = vmatprep.mubr.f32.mxu0 0.0
  %321 = vmatmul.mubr.f32.gmra.mrb[0].mxu0 %v254
  %v322 = vpop.f32.mrb[0].mxu0
  %v323 = vadd.f32 0.0, %v322
  %v324 = vpop.f32.mrb[0].mxu0
  %325 = vdwg.mxu0
  %v326 = vadd.f32 %v253, %v323
  %v327 = vxor.u32 %v326, 2147483648
  %v328 = vmul.f32 %v327, 1.442695
  %v329 = vpow.pop %v328
  %v330 = vadd.f32 %v329, 1.0
  %v331 = vrcp.pop %v330
  %v332 = vmul.f32 1.0, %v331
  %v333 = vtanh.pop %v326
  %v334 = vmul.f32 %v332, %v139
  %336 = vrot.lane.b32.xlu0 %v333, 64
  %v337 = vpop.permute.xlu0 %336
  %v339 = vmul.f32 %v332, %v337
  %341 = vrot.lane.b32.xlu0 %v339, 32
  %v342 = vpop.permute.xlu0 %341
  %v344 = vadd.f32 %v334, %v342
  %v345 = vtanh.pop %v344
  %347 = vrot.lane.b32.xlu0 %v345, 64
  %v348 = vpop.permute.xlu0 %347
  %v350 = vmul.f32 %v332, %v348
  %vm351 = vcmp.gt.s32.totalorder %v27, 1
  %v352 = vsel %vm351, %v350, %v138
  %v353 = vsel %vm351, %v344, %v139
  %v354 = vsel %vm351, %v350, 0.0
  %356 = vrot.lane.b32.xlu0 %v354, 32
  %v357 = vpop.permute.xlu0 %356
  %s359 = scalar_lea.vmem %s5, 8
  %360 = vst.msk [vmem:[%s359] sm:$0xff] %vm38, %v357
  %s361 = scalar_lea.vmem %s145, 48
  %v362 = vld [vmem:[%s361] sm:$0xff]
  %v363 = vsel %vm38, %v248, 0
  %365 = vmatprep.subr.mxu0 0.0
  %366 = vmatpush1.msra.mxu0 %v33
  %367 = vmatprep.subr.mxu0 0.0
  %368 = vmatpush1.msra.mxu0 %v34
  %369 = vmatprep.subr.mxu0 0.0
  %370 = vmatpush1.msra.mxu0 %v35
  %371 = vmatprep.subr.mxu0 0.0
  %372 = vmatpush1.msra.mxu0 %v36
  %373 = vmatprep.subr.mxu0 0.0
  %374 = vmatpush1.msra.mxu0 0.0
  %375 = vmatprep.subr.mxu0 0.0
  %376 = vmatpush1.msra.mxu0 0.0
  %377 = vmatprep.subr.mxu0 0.0
  %378 = vmatpush1.msra.mxu0 0.0
  %379 = vmatprep.subr.mxu0 0.0
  %380 = vmatpush1.msra.mxu0 0.0
  %381 = vmatprep.subr.mxu0 0.0
  %382 = vmatpush1.msra.mxu0 0.0
  %383 = vmatprep.subr.mxu0 0.0
  %384 = vmatpush1.msra.mxu0 0.0
  %385 = vmatprep.subr.mxu0 0.0
  %386 = vmatpush1.msra.mxu0 0.0
  %387 = vmatprep.subr.mxu0 0.0
  %388 = vmatpush1.msra.mxu0 0.0
  %389 = vmatprep.subr.mxu0 0.0
  %390 = vmatpush1.msra.mxu0 0.0
  %391 = vmatprep.subr.mxu0 0.0
  %392 = vmatpush1.msra.mxu0 0.0
  %393 = vmatprep.subr.mxu0 0.0
  %394 = vmatpush1.msra.mxu0 0.0
  %395 = vmatprep.subr.mxu0 0.0
  %396 = vmatpush1.msra.mxu0 0.0
  %397 = vmatprep.subr.mxu0 0.0
  %398 = vmatpush1.msra.mxu0 0.0
  %399 = vmatprep.subr.mxu0 0.0
  %400 = vmatpush1.msra.mxu0 0.0
  %401 = vmatprep.subr.mxu0 0.0
  %402 = vmatpush1.msra.mxu0 0.0
  %403 = vmatprep.subr.mxu0 0.0
  %404 = vmatpush1.msra.mxu0 0.0
  %405 = vmatprep.subr.mxu0 0.0
  %406 = vmatpush1.msra.mxu0 0.0
  %407 = vmatprep.subr.mxu0 0.0
  %408 = vmatpush1.msra.mxu0 0.0
  %409 = vmatprep.subr.mxu0 0.0
  %410 = vmatpush1.msra.mxu0 0.0
  %411 = vmatprep.subr.mxu0 0.0
  %412 = vmatpush1.msra.mxu0 0.0
  %413 = vmatprep.subr.mxu0 0.0
  %414 = vmatpush1.msra.mxu0 0.0
  %415 = vmatprep.subr.mxu0 0.0
  %416 = vmatpush1.msra.mxu0 0.0
  %417 = vmatprep.subr.mxu0 0.0
  %418 = vmatpush1.msra.mxu0 0.0
  %419 = vmatprep.subr.mxu0 0.0
  %420 = vmatpush1.msra.mxu0 0.0
  %421 = vmatprep.subr.mxu0 0.0
  %422 = vmatpush1.msra.mxu0 0.0
  %423 = vmatprep.subr.mxu0 0.0
  %424 = vmatpush1.msra.mxu0 0.0
  %425 = vmatprep.subr.mxu0 0.0
  %426 = vmatpush1.msra.mxu0 0.0
  %427 = vmatprep.subr.mxu0 0.0
  %428 = vmatpush1.msra.mxu0 0.0
  %429 = vmatprep.mubr.f32.mxu0 0.0
  %430 = vmatmul.mubr.f32.gmra.mrb[0].mxu0 %v363
  %v431 = vpop.f32.mrb[0].mxu0
  %v432 = vadd.f32 0.0, %v431
  %v433 = vpop.f32.mrb[0].mxu0
  %434 = vdwg.mxu0
  %v435 = vadd.f32 %v362, %v432
  %v436 = vxor.u32 %v435, 2147483648
  %v437 = vmul.f32 %v436, 1.442695
  %v438 = vpow.pop %v437
  %v439 = vadd.f32 %v438, 1.0
  %v440 = vrcp.pop %v439
  %v441 = vmul.f32 1.0, %v440
  %v442 = vtanh.pop %v435
  %v443 = vmul.f32 %v441, %v245
  %445 = vrot.lane.b32.xlu0 %v442, 64
  %v446 = vpop.permute.xlu0 %445
  %v448 = vmul.f32 %v441, %v446
  %450 = vrot.lane.b32.xlu0 %v448, 32
  %v451 = vpop.permute.xlu0 %450
  %v453 = vadd.f32 %v443, %v451
  %v454 = vtanh.pop %v453
  %456 = vrot.lane.b32.xlu0 %v454, 64
  %v457 = vpop.permute.xlu0 %456
  %v459 = vmul.f32 %v441, %v457
  %vm460 = vcmp.gt.s32.totalorder %v27, 6
  %v461 = vsel %vm460, %v459, %v244
  %v462 = vsel %vm460, %v453, %v245
  %v463 = vsel %vm460, %v459, 0.0
  %465 = vrot.lane.b32.xlu0 %v463, 32
  %v466 = vpop.permute.xlu0 %465
  %s468 = scalar_lea.vmem [#allocation2], 48
  %469 = vst.msk [vmem:[%s468] sm:$0xff] %vm38, %v466
  %s470 = scalar_lea.vmem %s1, 16
  %v471 = vld [vmem:[%s470] sm:$0xff]
  %473 = vrot.lane.b32.xlu0 %v352, 32
  %v474 = vpop.permute.xlu0 %473
  %v475 = vsel %vm38, %v474, 0
  %477 = vmatprep.subr.mxu0 0.0
  %478 = vmatpush1.msra.mxu0 %v28
  %479 = vmatprep.subr.mxu0 0.0
  %480 = vmatpush1.msra.mxu0 %v29
  %481 = vmatprep.subr.mxu0 0.0
  %482 = vmatpush1.msra.mxu0 %v30
  %483 = vmatprep.subr.mxu0 0.0
  %484 = vmatpush1.msra.mxu0 %v31
  %485 = vmatprep.subr.mxu0 0.0
  %486 = vmatpush1.msra.mxu0 0.0
  %487 = vmatprep.subr.mxu0 0.0
  %488 = vmatpush1.msra.mxu0 0.0
  %489 = vmatprep.subr.mxu0 0.0
  %490 = vmatpush1.msra.mxu0 0.0
  %491 = vmatprep.subr.mxu0 0.0
  %492 = vmatpush1.msra.mxu0 0.0
  %493 = vmatprep.subr.mxu0 0.0
  %494 = vmatpush1.msra.mxu0 0.0
  %495 = vmatprep.subr.mxu0 0.0
  %496 = vmatpush1.msra.mxu0 0.0
  %497 = vmatprep.subr.mxu0 0.0
  %498 = vmatpush1.msra.mxu0 0.0
  %499 = vmatprep.subr.mxu0 0.0
  %500 = vmatpush1.msra.mxu0 0.0
  %501 = vmatprep.subr.mxu0 0.0
  %502 = vmatpush1.msra.mxu0 0.0
  %503 = vmatprep.subr.mxu0 0.0
  %504 = vmatpush1.msra.mxu0 0.0
  %505 = vmatprep.subr.mxu0 0.0
  %506 = vmatpush1.msra.mxu0 0.0
  %507 = vmatprep.subr.mxu0 0.0
  %508 = vmatpush1.msra.mxu0 0.0
  %509 = vmatprep.subr.mxu0 0.0
  %510 = vmatpush1.msra.mxu0 0.0
  %511 = vmatprep.subr.mxu0 0.0
  %512 = vmatpush1.msra.mxu0 0.0
  %513 = vmatprep.subr.mxu0 0.0
  %514 = vmatpush1.msra.mxu0 0.0
  %515 = vmatprep.subr.mxu0 0.0
  %516 = vmatpush1.msra.mxu0 0.0
  %517 = vmatprep.subr.mxu0 0.0
  %518 = vmatpush1.msra.mxu0 0.0
  %519 = vmatprep.subr.mxu0 0.0
  %520 = vmatpush1.msra.mxu0 0.0
  %521 = vmatprep.subr.mxu0 0.0
  %522 = vmatpush1.msra.mxu0 0.0
  %523 = vmatprep.subr.mxu0 0.0
  %524 = vmatpush1.msra.mxu0 0.0
  %525 = vmatprep.subr.mxu0 0.0
  %526 = vmatpush1.msra.mxu0 0.0
  %527 = vmatprep.subr.mxu0 0.0
  %528 = vmatpush1.msra.mxu0 0.0
  %529 = vmatprep.subr.mxu0 0.0
  %530 = vmatpush1.msra.mxu0 0.0
  %531 = vmatprep.subr.mxu0 0.0
  %532 = vmatpush1.msra.mxu0 0.0
  %533 = vmatprep.subr.mxu0 0.0
  %534 = vmatpush1.msra.mxu0 0.0
  %535 = vmatprep.subr.mxu0 0.0
  %536 = vmatpush1.msra.mxu0 0.0
  %537 = vmatprep.subr.mxu0 0.0
  %538 = vmatpush1.msra.mxu0 0.0
  %539 = vmatprep.subr.mxu0 0.0
  %540 = vmatpush1.msra.mxu0 0.0
  %541 = vmatprep.mubr.f32.mxu0 0.0
  %542 = vmatmul.mubr.f32.gmra.mrb[0].mxu0 %v475
  %v543 = vpop.f32.mrb[0].mxu0
  %v544 = vadd.f32 0.0, %v543
  %v545 = vpop.f32.mrb[0].mxu0
  %546 = vdwg.mxu0
  %v547 = vadd.f32 %v471, %v544
  %v548 = vxor.u32 %v547, 2147483648
  %v549 = vmul.f32 %v548, 1.442695
  %v550 = vpow.pop %v549
  %v551 = vadd.f32 %v550, 1.0
  %v552 = vrcp.pop %v551
  %v553 = vmul.f32 1.0, %v552
  %v554 = vtanh.pop %v547
  %v555 = vmul.f32 %v553, %v353
  %557 = vrot.lane.b32.xlu0 %v554, 64
  %v558 = vpop.permute.xlu0 %557
  %v560 = vmul.f32 %v553, %v558
  %562 = vrot.lane.b32.xlu0 %v560, 32
  %v563 = vpop.permute.xlu0 %562
  %v565 = vadd.f32 %v555, %v563
  %v566 = vtanh.pop %v565
  %568 = vrot.lane.b32.xlu0 %v566, 64
  %v569 = vpop.permute.xlu0 %568
  %v571 = vmul.f32 %v553, %v569
  %vm572 = vcmp.gt.s32.totalorder %v27, 2
  %v573 = vsel %vm572, %v571, %v352
  %v574 = vsel %vm572, %v565, %v353
  %v575 = vsel %vm572, %v571, 0.0
  %577 = vrot.lane.b32.xlu0 %v575, 32
  %v578 = vpop.permute.xlu0 %577
  %s580 = scalar_lea.vmem %s5, 16
  %581 = vst.msk [vmem:[%s580] sm:$0xff] %vm38, %v578
  %s582 = scalar_lea.vmem %s145, 40
  %v583 = vld [vmem:[%s582] sm:$0xff]
  %585 = vrot.lane.b32.xlu0 %v461, 32
  %v586 = vpop.permute.xlu0 %585
  %v587 = vsel %vm38, %v586, 0
  %589 = vmatprep.subr.mxu0 0.0
  %590 = vmatpush1.msra.mxu0 %v33
  %591 = vmatprep.subr.mxu0 0.0
  %592 = vmatpush1.msra.mxu0 %v34
  %593 = vmatprep.subr.mxu0 0.0
  %594 = vmatpush1.msra.mxu0 %v35
  %595 = vmatprep.subr.mxu0 0.0
  %596 = vmatpush1.msra.mxu0 %v36
  %597 = vmatprep.subr.mxu0 0.0
  %598 = vmatpush1.msra.mxu0 0.0
  %599 = vmatprep.subr.mxu0 0.0
  %600 = vmatpush1.msra.mxu0 0.0
  %601 = vmatprep.subr.mxu0 0.0
  %602 = vmatpush1.msra.mxu0 0.0
  %603 = vmatprep.subr.mxu0 0.0
  %604 = vmatpush1.msra.mxu0 0.0
  %605 = vmatprep.subr.mxu0 0.0
  %606 = vmatpush1.msra.mxu0 0.0
  %607 = vmatprep.subr.mxu0 0.0
  %608 = vmatpush1.msra.mxu0 0.0
  %609 = vmatprep.subr.mxu0 0.0
  %610 = vmatpush1.msra.mxu0 0.0
  %611 = vmatprep.subr.mxu0 0.0
  %612 = vmatpush1.msra.mxu0 0.0
  %613 = vmatprep.subr.mxu0 0.0
  %614 = vmatpush1.msra.mxu0 0.0
  %615 = vmatprep.subr.mxu0 0.0
  %616 = vmatpush1.msra.mxu0 0.0
  %617 = vmatprep.subr.mxu0 0.0
  %618 = vmatpush1.msra.mxu0 0.0
  %619 = vmatprep.subr.mxu0 0.0
  %620 = vmatpush1.msra.mxu0 0.0
  %621 = vmatprep.subr.mxu0 0.0
  %622 = vmatpush1.msra.mxu0 0.0
  %623 = vmatprep.subr.mxu0 0.0
  %624 = vmatpush1.msra.mxu0 0.0
  %625 = vmatprep.subr.mxu0 0.0
  %626 = vmatpush1.msra.mxu0 0.0
  %627 = vmatprep.subr.mxu0 0.0
  %628 = vmatpush1.msra.mxu0 0.0
  %629 = vmatprep.subr.mxu0 0.0
  %630 = vmatpush1.msra.mxu0 0.0
  %631 = vmatprep.subr.mxu0 0.0
  %632 = vmatpush1.msra.mxu0 0.0
  %633 = vmatprep.subr.mxu0 0.0
  %634 = vmatpush1.msra.mxu0 0.0
  %635 = vmatprep.subr.mxu0 0.0
  %636 = vmatpush1.msra.mxu0 0.0
  %637 = vmatprep.subr.mxu0 0.0
  %638 = vmatpush1.msra.mxu0 0.0
  %639 = vmatprep.subr.mxu0 0.0
  %640 = vmatpush1.msra.mxu0 0.0
  %641 = vmatprep.subr.mxu0 0.0
  %642 = vmatpush1.msra.mxu0 0.0
  %643 = vmatprep.subr.mxu0 0.0
  %644 = vmatpush1.msra.mxu0 0.0
  %645 = vmatprep.subr.mxu0 0.0
  %646 = vmatpush1.msra.mxu0 0.0
  %647 = vmatprep.subr.mxu0 0.0
  %648 = vmatpush1.msra.mxu0 0.0
  %649 = vmatprep.subr.mxu0 0.0
  %650 = vmatpush1.msra.mxu0 0.0
  %651 = vmatprep.subr.mxu0 0.0
  %652 = vmatpush1.msra.mxu0 0.0
  %653 = vmatprep.mubr.f32.mxu0 0.0
  %654 = vmatmul.mubr.f32.gmra.mrb[0].mxu0 %v587
  %v655 = vpop.f32.mrb[0].mxu0
  %v656 = vadd.f32 0.0, %v655
  %v657 = vpop.f32.mrb[0].mxu0
  %658 = vdwg.mxu0
  %v659 = vadd.f32 %v583, %v656
  %v660 = vxor.u32 %v659, 2147483648
  %v661 = vmul.f32 %v660, 1.442695
  %v662 = vpow.pop %v661
  %v663 = vadd.f32 %v662, 1.0
  %v664 = vrcp.pop %v663
  %v665 = vmul.f32 1.0, %v664
  %v666 = vtanh.pop %v659
  %v667 = vmul.f32 %v665, %v462
  %669 = vrot.lane.b32.xlu0 %v666, 64
  %v670 = vpop.permute.xlu0 %669
  %v672 = vmul.f32 %v665, %v670
  %674 = vrot.lane.b32.xlu0 %v672, 32
  %v675 = vpop.permute.xlu0 %674
  %v677 = vadd.f32 %v667, %v675
  %v678 = vtanh.pop %v677
  %680 = vrot.lane.b32.xlu0 %v678, 64
  %v681 = vpop.permute.xlu0 %680
  %v683 = vmul.f32 %v665, %v681
  %vm684 = vcmp.gt.s32.totalorder %v27, 5
  %v685 = vsel %vm684, %v683, %v461
  %v686 = vsel %vm684, %v677, %v462
  %v687 = vsel %vm684, %v683, 0.0
  %689 = vrot.lane.b32.xlu0 %v687, 32
  %v690 = vpop.permute.xlu0 %689
  %s692 = scalar_lea.vmem [#allocation2], 40
  %693 = vst.msk [vmem:[%s692] sm:$0xff] %vm38, %v690
  %s694 = scalar_lea.vmem %s1, 24
  %v695 = vld [vmem:[%s694] sm:$0xff]
  %697 = vrot.lane.b32.xlu0 %v573, 32
  %v698 = vpop.permute.xlu0 %697
  %v699 = vsel %vm38, %v698, 0
  %701 = vmatprep.subr.mxu0 0.0
  %702 = vmatpush1.msra.mxu0 %v28
  %703 = vmatprep.subr.mxu0 0.0
  %704 = vmatpush1.msra.mxu0 %v29
  %705 = vmatprep.subr.mxu0 0.0
  %706 = vmatpush1.msra.mxu0 %v30
  %707 = vmatprep.subr.mxu0 0.0
  %708 = vmatpush1.msra.mxu0 %v31
  %709 = vmatprep.subr.mxu0 0.0
  %710 = vmatpush1.msra.mxu0 0.0
  %711 = vmatprep.subr.mxu0 0.0
  %712 = vmatpush1.msra.mxu0 0.0
  %713 = vmatprep.subr.mxu0 0.0
  %714 = vmatpush1.msra.mxu0 0.0
  %715 = vmatprep.subr.mxu0 0.0
  %716 = vmatpush1.msra.mxu0 0.0
  %717 = vmatprep.subr.mxu0 0.0
  %718 = vmatpush1.msra.mxu0 0.0
  %719 = vmatprep.subr.mxu0 0.0
  %720 = vmatpush1.msra.mxu0 0.0
  %721 = vmatprep.subr.mxu0 0.0
  %722 = vmatpush1.msra.mxu0 0.0
  %723 = vmatprep.subr.mxu0 0.0
  %724 = vmatpush1.msra.mxu0 0.0
  %725 = vmatprep.subr.mxu0 0.0
  %726 = vmatpush1.msra.mxu0 0.0
  %727 = vmatprep.subr.mxu0 0.0
  %728 = vmatpush1.msra.mxu0 0.0
  %729 = vmatprep.subr.mxu0 0.0
  %730 = vmatpush1.msra.mxu0 0.0
  %731 = vmatprep.subr.mxu0 0.0
  %732 = vmatpush1.msra.mxu0 0.0
  %733 = vmatprep.subr.mxu0 0.0
  %734 = vmatpush1.msra.mxu0 0.0
  %735 = vmatprep.subr.mxu0 0.0
  %736 = vmatpush1.msra.mxu0 0.0
  %737 = vmatprep.subr.mxu0 0.0
  %738 = vmatpush1.msra.mxu0 0.0
  %739 = vmatprep.subr.mxu0 0.0
  %740 = vmatpush1.msra.mxu0 0.0
  %741 = vmatprep.subr.mxu0 0.0
  %742 = vmatpush1.msra.mxu0 0.0
  %743 = vmatprep.subr.mxu0 0.0
  %744 = vmatpush1.msra.mxu0 0.0
  %745 = vmatprep.subr.mxu0 0.0
  %746 = vmatpush1.msra.mxu0 0.0
  %747 = vmatprep.subr.mxu0 0.0
  %748 = vmatpush1.msra.mxu0 0.0
  %749 = vmatprep.subr.mxu0 0.0
  %750 = vmatpush1.msra.mxu0 0.0
  %751 = vmatprep.subr.mxu0 0.0
  %752 = vmatpush1.msra.mxu0 0.0
  %753 = vmatprep.subr.mxu0 0.0
  %754 = vmatpush1.msra.mxu0 0.0
  %755 = vmatprep.subr.mxu0 0.0
  %756 = vmatpush1.msra.mxu0 0.0
  %757 = vmatprep.subr.mxu0 0.0
  %758 = vmatpush1.msra.mxu0 0.0
  %759 = vmatprep.subr.mxu0 0.0
  %760 = vmatpush1.msra.mxu0 0.0
  %761 = vmatprep.subr.mxu0 0.0
  %762 = vmatpush1.msra.mxu0 0.0
  %763 = vmatprep.subr.mxu0 0.0
  %764 = vmatpush1.msra.mxu0 0.0
  %765 = vmatprep.mubr.f32.mxu0 0.0
  %766 = vmatmul.mubr.f32.gmra.mrb[0].mxu0 %v699
  %v767 = vpop.f32.mrb[0].mxu0
  %v768 = vadd.f32 0.0, %v767
  %v769 = vpop.f32.mrb[0].mxu0
  %770 = vdwg.mxu0
  %v771 = vadd.f32 %v695, %v768
  %v772 = vxor.u32 %v771, 2147483648
  %v773 = vmul.f32 %v772, 1.442695
  %v774 = vpow.pop %v773
  %v775 = vadd.f32 %v774, 1.0
  %v776 = vrcp.pop %v775
  %v777 = vmul.f32 1.0, %v776
  %v778 = vtanh.pop %v771
  %v779 = vmul.f32 %v777, %v574
  %781 = vrot.lane.b32.xlu0 %v778, 64
  %v782 = vpop.permute.xlu0 %781
  %v784 = vmul.f32 %v777, %v782
  %786 = vrot.lane.b32.xlu0 %v784, 32
  %v787 = vpop.permute.xlu0 %786
  %v789 = vadd.f32 %v779, %v787
  %v790 = vtanh.pop %v789
  %792 = vrot.lane.b32.xlu0 %v790, 64
  %v793 = vpop.permute.xlu0 %792
  %v795 = vmul.f32 %v777, %v793
  %vm796 = vcmp.gt.s32.totalorder %v27, 3
  %v797 = vsel %vm796, %v795, %v573
  %v798 = vsel %vm796, %v789, %v574
  %v799 = vsel %vm796, %v795, 0.0
  %801 = vrot.lane.b32.xlu0 %v799, 32
  %v802 = vpop.permute.xlu0 %801
  %s804 = scalar_lea.vmem %s5, 24
  %805 = vst.msk [vmem:[%s804] sm:$0xff] %vm38, %v802
  %s806 = scalar_lea.vmem %s145, 32
  %v807 = vld [vmem:[%s806] sm:$0xff]
  %809 = vrot.lane.b32.xlu0 %v685, 32
  %v810 = vpop.permute.xlu0 %809
  %v811 = vsel %vm38, %v810, 0
  %813 = vmatprep.subr.mxu0 0.0
  %814 = vmatpush1.msra.mxu0 %v33
  %815 = vmatprep.subr.mxu0 0.0
  %816 = vmatpush1.msra.mxu0 %v34
  %817 = vmatprep.subr.mxu0 0.0
  %818 = vmatpush1.msra.mxu0 %v35
  %819 = vmatprep.subr.mxu0 0.0
  %820 = vmatpush1.msra.mxu0 %v36
  %821 = vmatprep.subr.mxu0 0.0
  %822 = vmatpush1.msra.mxu0 0.0
  %823 = vmatprep.subr.mxu0 0.0
  %824 = vmatpush1.msra.mxu0 0.0
  %825 = vmatprep.subr.mxu0 0.0
  %826 = vmatpush1.msra.mxu0 0.0
  %827 = vmatprep.subr.mxu0 0.0
  %828 = vmatpush1.msra.mxu0 0.0
  %829 = vmatprep.subr.mxu0 0.0
  %830 = vmatpush1.msra.mxu0 0.0
  %831 = vmatprep.subr.mxu0 0.0
  %832 = vmatpush1.msra.mxu0 0.0
  %833 = vmatprep.subr.mxu0 0.0
  %834 = vmatpush1.msra.mxu0 0.0
  %835 = vmatprep.subr.mxu0 0.0
  %836 = vmatpush1.msra.mxu0 0.0
  %837 = vmatprep.subr.mxu0 0.0
  %838 = vmatpush1.msra.mxu0 0.0
  %839 = vmatprep.subr.mxu0 0.0
  %840 = vmatpush1.msra.mxu0 0.0
  %841 = vmatprep.subr.mxu0 0.0
  %842 = vmatpush1.msra.mxu0 0.0
  %843 = vmatprep.subr.mxu0 0.0
  %844 = vmatpush1.msra.mxu0 0.0
  %845 = vmatprep.subr.mxu0 0.0
  %846 = vmatpush1.msra.mxu0 0.0
  %847 = vmatprep.subr.mxu0 0.0
  %848 = vmatpush1.msra.mxu0 0.0
  %849 = vmatprep.subr.mxu0 0.0
  %850 = vmatpush1.msra.mxu0 0.0
  %851 = vmatprep.subr.mxu0 0.0
  %852 = vmatpush1.msra.mxu0 0.0
  %853 = vmatprep.subr.mxu0 0.0
  %854 = vmatpush1.msra.mxu0 0.0
  %855 = vmatprep.subr.mxu0 0.0
  %856 = vmatpush1.msra.mxu0 0.0
  %857 = vmatprep.subr.mxu0 0.0
  %858 = vmatpush1.msra.mxu0 0.0
  %859 = vmatprep.subr.mxu0 0.0
  %860 = vmatpush1.msra.mxu0 0.0
  %861 = vmatprep.subr.mxu0 0.0
  %862 = vmatpush1.msra.mxu0 0.0
  %863 = vmatprep.subr.mxu0 0.0
  %864 = vmatpush1.msra.mxu0 0.0
  %865 = vmatprep.subr.mxu0 0.0
  %866 = vmatpush1.msra.mxu0 0.0
  %867 = vmatprep.subr.mxu0 0.0
  %868 = vmatpush1.msra.mxu0 0.0
  %869 = vmatprep.subr.mxu0 0.0
  %870 = vmatpush1.msra.mxu0 0.0
  %871 = vmatprep.subr.mxu0 0.0
  %872 = vmatpush1.msra.mxu0 0.0
  %873 = vmatprep.subr.mxu0 0.0
  %874 = vmatpush1.msra.mxu0 0.0
  %875 = vmatprep.subr.mxu0 0.0
  %876 = vmatpush1.msra.mxu0 0.0
  %877 = vmatprep.mubr.f32.mxu0 0.0
  %878 = vmatmul.mubr.f32.gmra.mrb[0].mxu0 %v811
  %v879 = vpop.f32.mrb[0].mxu0
  %v880 = vadd.f32 0.0, %v879
  %v881 = vpop.f32.mrb[0].mxu0
  %882 = vdwg.mxu0
  %v883 = vadd.f32 %v807, %v880
  %v884 = vxor.u32 %v883, 2147483648
  %v885 = vmul.f32 %v884, 1.442695
  %v886 = vpow.pop %v885
  %v887 = vadd.f32 %v886, 1.0
  %v888 = vrcp.pop %v887
  %v889 = vmul.f32 1.0, %v888
  %v890 = vtanh.pop %v883
  %v891 = vmul.f32 %v889, %v686
  %893 = vrot.lane.b32.xlu0 %v890, 64
  %v894 = vpop.permute.xlu0 %893
  %v896 = vmul.f32 %v889, %v894
  %898 = vrot.lane.b32.xlu0 %v896, 32
  %v899 = vpop.permute.xlu0 %898
  %v901 = vadd.f32 %v891, %v899
  %v902 = vtanh.pop %v901
  %904 = vrot.lane.b32.xlu0 %v902, 64
  %v905 = vpop.permute.xlu0 %904
  %v907 = vmul.f32 %v889, %v905
  %vm908 = vcmp.gt.s32.totalorder %v27, 4
  %v909 = vsel %vm908, %v907, %v685
  %v910 = vsel %vm908, %v901, %v686
  %v911 = vsel %vm908, %v907, 0.0
  %913 = vrot.lane.b32.xlu0 %v911, 32
  %v914 = vpop.permute.xlu0 %913
  %s916 = scalar_lea.vmem [#allocation2], 32
  %917 = vst.msk [vmem:[%s916] sm:$0xff] %vm38, %v914
  %s918 = scalar_lea.vmem %s1, 32
  %v919 = vld [vmem:[%s918] sm:$0xff]
  %921 = vrot.lane.b32.xlu0 %v797, 32
  %v922 = vpop.permute.xlu0 %921
  %v923 = vsel %vm38, %v922, 0
  %925 = vmatprep.subr.mxu0 0.0
  %926 = vmatpush1.msra.mxu0 %v28
  %927 = vmatprep.subr.mxu0 0.0
  %928 = vmatpush1.msra.mxu0 %v29
  %929 = vmatprep.subr.mxu0 0.0
  %930 = vmatpush1.msra.mxu0 %v30
  %931 = vmatprep.subr.mxu0 0.0
  %932 = vmatpush1.msra.mxu0 %v31
  %933 = vmatprep.subr.mxu0 0.0
  %934 = vmatpush1.msra.mxu0 0.0
  %935 = vmatprep.subr.mxu0 0.0
  %936 = vmatpush1.msra.mxu0 0.0
  %937 = vmatprep.subr.mxu0 0.0
  %938 = vmatpush1.msra.mxu0 0.0
  %939 = vmatprep.subr.mxu0 0.0
  %940 = vmatpush1.msra.mxu0 0.0
  %941 = vmatprep.subr.mxu0 0.0
  %942 = vmatpush1.msra.mxu0 0.0
  %943 = vmatprep.subr.mxu0 0.0
  %944 = vmatpush1.msra.mxu0 0.0
  %945 = vmatprep.subr.mxu0 0.0
  %946 = vmatpush1.msra.mxu0 0.0
  %947 = vmatprep.subr.mxu0 0.0
  %948 = vmatpush1.msra.mxu0 0.0
  %949 = vmatprep.subr.mxu0 0.0
  %950 = vmatpush1.msra.mxu0 0.0
  %951 = vmatprep.subr.mxu0 0.0
  %952 = vmatpush1.msra.mxu0 0.0
  %953 = vmatprep.subr.mxu0 0.0
  %954 = vmatpush1.msra.mxu0 0.0
  %955 = vmatprep.subr.mxu0 0.0
  %956 = vmatpush1.msra.mxu0 0.0
  %957 = vmatprep.subr.mxu0 0.0
  %958 = vmatpush1.msra.mxu0 0.0
  %959 = vmatprep.subr.mxu0 0.0
  %960 = vmatpush1.msra.mxu0 0.0
  %961 = vmatprep.subr.mxu0 0.0
  %962 = vmatpush1.msra.mxu0 0.0
  %963 = vmatprep.subr.mxu0 0.0
  %964 = vmatpush1.msra.mxu0 0.0
  %965 = vmatprep.subr.mxu0 0.0
  %966 = vmatpush1.msra.mxu0 0.0
  %967 = vmatprep.subr.mxu0 0.0
  %968 = vmatpush1.msra.mxu0 0.0
  %969 = vmatprep.subr.mxu0 0.0
  %970 = vmatpush1.msra.mxu0 0.0
  %971 = vmatprep.subr.mxu0 0.0
  %972 = vmatpush1.msra.mxu0 0.0
  %973 = vmatprep.subr.mxu0 0.0
  %974 = vmatpush1.msra.mxu0 0.0
  %975 = vmatprep.subr.mxu0 0.0
  %976 = vmatpush1.msra.mxu0 0.0
  %977 = vmatprep.subr.mxu0 0.0
  %978 = vmatpush1.msra.mxu0 0.0
  %979 = vmatprep.subr.mxu0 0.0
  %980 = vmatpush1.msra.mxu0 0.0
  %981 = vmatprep.subr.mxu0 0.0
  %982 = vmatpush1.msra.mxu0 0.0
  %983 = vmatprep.subr.mxu0 0.0
  %984 = vmatpush1.msra.mxu0 0.0
  %985 = vmatprep.subr.mxu0 0.0
  %986 = vmatpush1.msra.mxu0 0.0
  %987 = vmatprep.subr.mxu0 0.0
  %988 = vmatpush1.msra.mxu0 0.0
  %989 = vmatprep.mubr.f32.mxu0 0.0
  %990 = vmatmul.mubr.f32.gmra.mrb[0].mxu0 %v923
  %v991 = vpop.f32.mrb[0].mxu0
  %v992 = vadd.f32 0.0, %v991
  %v993 = vpop.f32.mrb[0].mxu0
  %994 = vdwg.mxu0
  %v995 = vadd.f32 %v919, %v992
  %v996 = vxor.u32 %v995, 2147483648
  %v997 = vmul.f32 %v996, 1.442695
  %v998 = vpow.pop %v997
  %v999 = vadd.f32 %v998, 1.0
  %v1000 = vrcp.pop %v999
  %v1001 = vmul.f32 1.0, %v1000
  %v1002 = vtanh.pop %v995
  %v1003 = vmul.f32 %v1001, %v798
  %1005 = vrot.lane.b32.xlu0 %v1002, 64
  %v1006 = vpop.permute.xlu0 %1005
  %v1008 = vmul.f32 %v1001, %v1006
  %1010 = vrot.lane.b32.xlu0 %v1008, 32
  %v1011 = vpop.permute.xlu0 %1010
  %v1013 = vadd.f32 %v1003, %v1011
  %v1014 = vtanh.pop %v1013
  %1016 = vrot.lane.b32.xlu0 %v1014, 64
  %v1017 = vpop.permute.xlu0 %1016
  %v1019 = vmul.f32 %v1001, %v1017
  %v1020 = vsel %vm908, %v1019, %v797
  %v1021 = vsel %vm908, %v1013, %v798
  %v1022 = vsel %vm908, %v1019, 0.0
  %1024 = vrot.lane.b32.xlu0 %v1022, 32
  %v1025 = vpop.permute.xlu0 %1024
  %s1027 = scalar_lea.vmem %s5, 32
  %1028 = vst.msk [vmem:[%s1027] sm:$0xff] %vm38, %v1025
  %s1029 = scalar_lea.vmem %s145, 24
  %v1030 = vld [vmem:[%s1029] sm:$0xff]
  %1032 = vrot.lane.b32.xlu0 %v909, 32
  %v1033 = vpop.permute.xlu0 %1032
  %v1034 = vsel %vm38, %v1033, 0
  %1036 = vmatprep.subr.mxu0 0.0
  %1037 = vmatpush1.msra.mxu0 %v33
  %1038 = vmatprep.subr.mxu0 0.0
  %1039 = vmatpush1.msra.mxu0 %v34
  %1040 = vmatprep.subr.mxu0 0.0
  %1041 = vmatpush1.msra.mxu0 %v35
  %1042 = vmatprep.subr.mxu0 0.0
  %1043 = vmatpush1.msra.mxu0 %v36
  %1044 = vmatprep.subr.mxu0 0.0
  %1045 = vmatpush1.msra.mxu0 0.0
  %1046 = vmatprep.subr.mxu0 0.0
  %1047 = vmatpush1.msra.mxu0 0.0
  %1048 = vmatprep.subr.mxu0 0.0
  %1049 = vmatpush1.msra.mxu0 0.0
  %1050 = vmatprep.subr.mxu0 0.0
  %1051 = vmatpush1.msra.mxu0 0.0
  %1052 = vmatprep.subr.mxu0 0.0
  %1053 = vmatpush1.msra.mxu0 0.0
  %1054 = vmatprep.subr.mxu0 0.0
  %1055 = vmatpush1.msra.mxu0 0.0
  %1056 = vmatprep.subr.mxu0 0.0
  %1057 = vmatpush1.msra.mxu0 0.0
  %1058 = vmatprep.subr.mxu0 0.0
  %1059 = vmatpush1.msra.mxu0 0.0
  %1060 = vmatprep.subr.mxu0 0.0
  %1061 = vmatpush1.msra.mxu0 0.0
  %1062 = vmatprep.subr.mxu0 0.0
  %1063 = vmatpush1.msra.mxu0 0.0
  %1064 = vmatprep.subr.mxu0 0.0
  %1065 = vmatpush1.msra.mxu0 0.0
  %1066 = vmatprep.subr.mxu0 0.0
  %1067 = vmatpush1.msra.mxu0 0.0
  %1068 = vmatprep.subr.mxu0 0.0
  %1069 = vmatpush1.msra.mxu0 0.0
  %1070 = vmatprep.subr.mxu0 0.0
  %1071 = vmatpush1.msra.mxu0 0.0
  %1072 = vmatprep.subr.mxu0 0.0
  %1073 = vmatpush1.msra.mxu0 0.0
  %1074 = vmatprep.subr.mxu0 0.0
  %1075 = vmatpush1.msra.mxu0 0.0
  %1076 = vmatprep.subr.mxu0 0.0
  %1077 = vmatpush1.msra.mxu0 0.0
  %1078 = vmatprep.subr.mxu0 0.0
  %1079 = vmatpush1.msra.mxu0 0.0
  %1080 = vmatprep.subr.mxu0 0.0
  %1081 = vmatpush1.msra.mxu0 0.0
  %1082 = vmatprep.subr.mxu0 0.0
  %1083 = vmatpush1.msra.mxu0 0.0
  %1084 = vmatprep.subr.mxu0 0.0
  %1085 = vmatpush1.msra.mxu0 0.0
  %1086 = vmatprep.subr.mxu0 0.0
  %1087 = vmatpush1.msra.mxu0 0.0
  %1088 = vmatprep.subr.mxu0 0.0
  %1089 = vmatpush1.msra.mxu0 0.0
  %1090 = vmatprep.subr.mxu0 0.0
  %1091 = vmatpush1.msra.mxu0 0.0
  %1092 = vmatprep.subr.mxu0 0.0
  %1093 = vmatpush1.msra.mxu0 0.0
  %1094 = vmatprep.subr.mxu0 0.0
  %1095 = vmatpush1.msra.mxu0 0.0
  %1096 = vmatprep.subr.mxu0 0.0
  %1097 = vmatpush1.msra.mxu0 0.0
  %1098 = vmatprep.subr.mxu0 0.0
  %1099 = vmatpush1.msra.mxu0 0.0
  %1100 = vmatprep.mubr.f32.mxu0 0.0
  %1101 = vmatmul.mubr.f32.gmra.mrb[0].mxu0 %v1034
  %v1102 = vpop.f32.mrb[0].mxu0
  %v1103 = vadd.f32 0.0, %v1102
  %v1104 = vpop.f32.mrb[0].mxu0
  %1105 = vdwg.mxu0
  %v1106 = vadd.f32 %v1030, %v1103
  %v1107 = vxor.u32 %v1106, 2147483648
  %v1108 = vmul.f32 %v1107, 1.442695
  %v1109 = vpow.pop %v1108
  %v1110 = vadd.f32 %v1109, 1.0
  %v1111 = vrcp.pop %v1110
  %v1112 = vmul.f32 1.0, %v1111
  %v1113 = vtanh.pop %v1106
  %v1114 = vmul.f32 %v1112, %v910
  %1116 = vrot.lane.b32.xlu0 %v1113, 64
  %v1117 = vpop.permute.xlu0 %1116
  %v1119 = vmul.f32 %v1112, %v1117
  %1121 = vrot.lane.b32.xlu0 %v1119, 32
  %v1122 = vpop.permute.xlu0 %1121
  %v1124 = vadd.f32 %v1114, %v1122
  %v1125 = vtanh.pop %v1124
  %1127 = vrot.lane.b32.xlu0 %v1125, 64
  %v1128 = vpop.permute.xlu0 %1127
  %v1130 = vmul.f32 %v1112, %v1128
  %v1131 = vsel %vm796, %v1130, %v909
  %v1132 = vsel %vm796, %v1124, %v910
  %v1133 = vsel %vm796, %v1130, 0.0
  %1135 = vrot.lane.b32.xlu0 %v1133, 32
  %v1136 = vpop.permute.xlu0 %1135
  %s1138 = scalar_lea.vmem [#allocation2], 24
  %1139 = vst.msk [vmem:[%s1138] sm:$0xff] %vm38, %v1136
  %s1140 = scalar_lea.vmem %s1, 40
  %v1141 = vld [vmem:[%s1140] sm:$0xff]
  %1143 = vrot.lane.b32.xlu0 %v1020, 32
  %v1144 = vpop.permute.xlu0 %1143
  %v1145 = vsel %vm38, %v1144, 0
  %1147 = vmatprep.subr.mxu0 0.0
  %1148 = vmatpush1.msra.mxu0 %v28
  %1149 = vmatprep.subr.mxu0 0.0
  %1150 = vmatpush1.msra.mxu0 %v29
  %1151 = vmatprep.subr.mxu0 0.0
  %1152 = vmatpush1.msra.mxu0 %v30
  %1153 = vmatprep.subr.mxu0 0.0
  %1154 = vmatpush1.msra.mxu0 %v31
  %1155 = vmatprep.subr.mxu0 0.0
  %1156 = vmatpush1.msra.mxu0 0.0
  %1157 = vmatprep.subr.mxu0 0.0
  %1158 = vmatpush1.msra.mxu0 0.0
  %1159 = vmatprep.subr.mxu0 0.0
  %1160 = vmatpush1.msra.mxu0 0.0
  %1161 = vmatprep.subr.mxu0 0.0
  %1162 = vmatpush1.msra.mxu0 0.0
  %1163 = vmatprep.subr.mxu0 0.0
  %1164 = vmatpush1.msra.mxu0 0.0
  %1165 = vmatprep.subr.mxu0 0.0
  %1166 = vmatpush1.msra.mxu0 0.0
  %1167 = vmatprep.subr.mxu0 0.0
  %1168 = vmatpush1.msra.mxu0 0.0
  %1169 = vmatprep.subr.mxu0 0.0
  %1170 = vmatpush1.msra.mxu0 0.0
  %1171 = vmatprep.subr.mxu0 0.0
  %1172 = vmatpush1.msra.mxu0 0.0
  %1173 = vmatprep.subr.mxu0 0.0
  %1174 = vmatpush1.msra.mxu0 0.0
  %1175 = vmatprep.subr.mxu0 0.0
  %1176 = vmatpush1.msra.mxu0 0.0
  %1177 = vmatprep.subr.mxu0 0.0
  %1178 = vmatpush1.msra.mxu0 0.0
  %1179 = vmatprep.subr.mxu0 0.0
  %1180 = vmatpush1.msra.mxu0 0.0
  %1181 = vmatprep.subr.mxu0 0.0
  %1182 = vmatpush1.msra.mxu0 0.0
  %1183 = vmatprep.subr.mxu0 0.0
  %1184 = vmatpush1.msra.mxu0 0.0
  %1185 = vmatprep.subr.mxu0 0.0
  %1186 = vmatpush1.msra.mxu0 0.0
  %1187 = vmatprep.subr.mxu0 0.0
  %1188 = vmatpush1.msra.mxu0 0.0
  %1189 = vmatprep.subr.mxu0 0.0
  %1190 = vmatpush1.msra.mxu0 0.0
  %1191 = vmatprep.subr.mxu0 0.0
  %1192 = vmatpush1.msra.mxu0 0.0
  %1193 = vmatprep.subr.mxu0 0.0
  %1194 = vmatpush1.msra.mxu0 0.0
  %1195 = vmatprep.subr.mxu0 0.0
  %1196 = vmatpush1.msra.mxu0 0.0
  %1197 = vmatprep.subr.mxu0 0.0
  %1198 = vmatpush1.msra.mxu0 0.0
  %1199 = vmatprep.subr.mxu0 0.0
  %1200 = vmatpush1.msra.mxu0 0.0
  %1201 = vmatprep.subr.mxu0 0.0
  %1202 = vmatpush1.msra.mxu0 0.0
  %1203 = vmatprep.subr.mxu0 0.0
  %1204 = vmatpush1.msra.mxu0 0.0
  %1205 = vmatprep.subr.mxu0 0.0
  %1206 = vmatpush1.msra.mxu0 0.0
  %1207 = vmatprep.subr.mxu0 0.0
  %1208 = vmatpush1.msra.mxu0 0.0
  %1209 = vmatprep.subr.mxu0 0.0
  %1210 = vmatpush1.msra.mxu0 0.0
  %1211 = vmatprep.mubr.f32.mxu0 0.0
  %1212 = vmatmul.mubr.f32.gmra.mrb[0].mxu0 %v1145
  %v1213 = vpop.f32.mrb[0].mxu0
  %v1214 = vadd.f32 0.0, %v1213
  %v1215 = vpop.f32.mrb[0].mxu0
  %1216 = vdwg.mxu0
  %v1217 = vadd.f32 %v1141, %v1214
  %v1218 = vxor.u32 %v1217, 2147483648
  %v1219 = vmul.f32 %v1218, 1.442695
  %v1220 = vpow.pop %v1219
  %v1221 = vadd.f32 %v1220, 1.0
  %v1222 = vrcp.pop %v1221
  %v1223 = vmul.f32 1.0, %v1222
  %v1224 = vtanh.pop %v1217
  %v1225 = vmul.f32 %v1223, %v1021
  %1227 = vrot.lane.b32.xlu0 %v1224, 64
  %v1228 = vpop.permute.xlu0 %1227
  %v1230 = vmul.f32 %v1223, %v1228
  %1232 = vrot.lane.b32.xlu0 %v1230, 32
  %v1233 = vpop.permute.xlu0 %1232
  %v1235 = vadd.f32 %v1225, %v1233
  %v1236 = vtanh.pop %v1235
  %1238 = vrot.lane.b32.xlu0 %v1236, 64
  %v1239 = vpop.permute.xlu0 %1238
  %v1241 = vmul.f32 %v1223, %v1239
  %v1242 = vsel %vm684, %v1241, %v1020
  %v1243 = vsel %vm684, %v1235, %v1021
  %v1244 = vsel %vm684, %v1241, 0.0
  %1246 = vrot.lane.b32.xlu0 %v1244, 32
  %v1247 = vpop.permute.xlu0 %1246
  %s1249 = scalar_lea.vmem %s5, 40
  %1250 = vst.msk [vmem:[%s1249] sm:$0xff] %vm38, %v1247
  %s1251 = scalar_lea.vmem %s145, 16
  %v1252 = vld [vmem:[%s1251] sm:$0xff]
  %1254 = vrot.lane.b32.xlu0 %v1131, 32
  %v1255 = vpop.permute.xlu0 %1254
  %v1256 = vsel %vm38, %v1255, 0
  %1258 = vmatprep.subr.mxu0 0.0
  %1259 = vmatpush1.msra.mxu0 %v33
  %1260 = vmatprep.subr.mxu0 0.0
  %1261 = vmatpush1.msra.mxu0 %v34
  %1262 = vmatprep.subr.mxu0 0.0
  %1263 = vmatpush1.msra.mxu0 %v35
  %1264 = vmatprep.subr.mxu0 0.0
  %1265 = vmatpush1.msra.mxu0 %v36
  %1266 = vmatprep.subr.mxu0 0.0
  %1267 = vmatpush1.msra.mxu0 0.0
  %1268 = vmatprep.subr.mxu0 0.0
  %1269 = vmatpush1.msra.mxu0 0.0
  %1270 = vmatprep.subr.mxu0 0.0
  %1271 = vmatpush1.msra.mxu0 0.0
  %1272 = vmatprep.subr.mxu0 0.0
  %1273 = vmatpush1.msra.mxu0 0.0
  %1274 = vmatprep.subr.mxu0 0.0
  %1275 = vmatpush1.msra.mxu0 0.0
  %1276 = vmatprep.subr.mxu0 0.0
  %1277 = vmatpush1.msra.mxu0 0.0
  %1278 = vmatprep.subr.mxu0 0.0
  %1279 = vmatpush1.msra.mxu0 0.0
  %1280 = vmatprep.subr.mxu0 0.0
  %1281 = vmatpush1.msra.mxu0 0.0
  %1282 = vmatprep.subr.mxu0 0.0
  %1283 = vmatpush1.msra.mxu0 0.0
  %1284 = vmatprep.subr.mxu0 0.0
  %1285 = vmatpush1.msra.mxu0 0.0
  %1286 = vmatprep.subr.mxu0 0.0
  %1287 = vmatpush1.msra.mxu0 0.0
  %1288 = vmatprep.subr.mxu0 0.0
  %1289 = vmatpush1.msra.mxu0 0.0
  %1290 = vmatprep.subr.mxu0 0.0
  %1291 = vmatpush1.msra.mxu0 0.0
  %1292 = vmatprep.subr.mxu0 0.0
  %1293 = vmatpush1.msra.mxu0 0.0
  %1294 = vmatprep.subr.mxu0 0.0
  %1295 = vmatpush1.msra.mxu0 0.0
  %1296 = vmatprep.subr.mxu0 0.0
  %1297 = vmatpush1.msra.mxu0 0.0
  %1298 = vmatprep.subr.mxu0 0.0
  %1299 = vmatpush1.msra.mxu0 0.0
  %1300 = vmatprep.subr.mxu0 0.0
  %1301 = vmatpush1.msra.mxu0 0.0
  %1302 = vmatprep.subr.mxu0 0.0
  %1303 = vmatpush1.msra.mxu0 0.0
  %1304 = vmatprep.subr.mxu0 0.0
  %1305 = vmatpush1.msra.mxu0 0.0
  %1306 = vmatprep.subr.mxu0 0.0
  %1307 = vmatpush1.msra.mxu0 0.0
  %1308 = vmatprep.subr.mxu0 0.0
  %1309 = vmatpush1.msra.mxu0 0.0
  %1310 = vmatprep.subr.mxu0 0.0
  %1311 = vmatpush1.msra.mxu0 0.0
  %1312 = vmatprep.subr.mxu0 0.0
  %1313 = vmatpush1.msra.mxu0 0.0
  %1314 = vmatprep.subr.mxu0 0.0
  %1315 = vmatpush1.msra.mxu0 0.0
  %1316 = vmatprep.subr.mxu0 0.0
  %1317 = vmatpush1.msra.mxu0 0.0
  %1318 = vmatprep.subr.mxu0 0.0
  %1319 = vmatpush1.msra.mxu0 0.0
  %1320 = vmatprep.subr.mxu0 0.0
  %1321 = vmatpush1.msra.mxu0 0.0
  %1322 = vmatprep.mubr.f32.mxu0 0.0
  %1323 = vmatmul.mubr.f32.gmra.mrb[0].mxu0 %v1256
  %v1324 = vpop.f32.mrb[0].mxu0
  %v1325 = vadd.f32 0.0, %v1324
  %v1326 = vpop.f32.mrb[0].mxu0
  %1327 = vdwg.mxu0
  %v1328 = vadd.f32 %v1252, %v1325
  %v1329 = vxor.u32 %v1328, 2147483648
  %v1330 = vmul.f32 %v1329, 1.442695
  %v1331 = vpow.pop %v1330
  %v1332 = vadd.f32 %v1331, 1.0
  %v1333 = vrcp.pop %v1332
  %v1334 = vmul.f32 1.0, %v1333
  %v1335 = vtanh.pop %v1328
  %v1336 = vmul.f32 %v1334, %v1132
  %1338 = vrot.lane.b32.xlu0 %v1335, 64
  %v1339 = vpop.permute.xlu0 %1338
  %v1341 = vmul.f32 %v1334, %v1339
  %1343 = vrot.lane.b32.xlu0 %v1341, 32
  %v1344 = vpop.permute.xlu0 %1343
  %v1346 = vadd.f32 %v1336, %v1344
  %v1347 = vtanh.pop %v1346
  %1349 = vrot.lane.b32.xlu0 %v1347, 64
  %v1350 = vpop.permute.xlu0 %1349
  %v1352 = vmul.f32 %v1334, %v1350
  %v1353 = vsel %vm572, %v1352, %v1131
  %v1354 = vsel %vm572, %v1346, %v1132
  %v1355 = vsel %vm572, %v1352, 0.0
  %1357 = vrot.lane.b32.xlu0 %v1355, 32
  %v1358 = vpop.permute.xlu0 %1357
  %s1360 = scalar_lea.vmem [#allocation2], 16
  %1361 = vst.msk [vmem:[%s1360] sm:$0xff] %vm38, %v1358
  %s1362 = scalar_lea.vmem %s1, 48
  %v1363 = vld [vmem:[%s1362] sm:$0xff]
  %1365 = vrot.lane.b32.xlu0 %v1242, 32
  %v1366 = vpop.permute.xlu0 %1365
  %v1367 = vsel %vm38, %v1366, 0
  %1369 = vmatprep.subr.mxu0 0.0
  %1370 = vmatpush1.msra.mxu0 %v28
  %1371 = vmatprep.subr.mxu0 0.0
  %1372 = vmatpush1.msra.mxu0 %v29
  %1373 = vmatprep.subr.mxu0 0.0
  %1374 = vmatpush1.msra.mxu0 %v30
  %1375 = vmatprep.subr.mxu0 0.0
  %1376 = vmatpush1.msra.mxu0 %v31
  %1377 = vmatprep.subr.mxu0 0.0
  %1378 = vmatpush1.msra.mxu0 0.0
  %1379 = vmatprep.subr.mxu0 0.0
  %1380 = vmatpush1.msra.mxu0 0.0
  %1381 = vmatprep.subr.mxu0 0.0
  %1382 = vmatpush1.msra.mxu0 0.0
  %1383 = vmatprep.subr.mxu0 0.0
  %1384 = vmatpush1.msra.mxu0 0.0
  %1385 = vmatprep.subr.mxu0 0.0
  %1386 = vmatpush1.msra.mxu0 0.0
  %1387 = vmatprep.subr.mxu0 0.0
  %1388 = vmatpush1.msra.mxu0 0.0
  %1389 = vmatprep.subr.mxu0 0.0
  %1390 = vmatpush1.msra.mxu0 0.0
  %1391 = vmatprep.subr.mxu0 0.0
  %1392 = vmatpush1.msra.mxu0 0.0
  %1393 = vmatprep.subr.mxu0 0.0
  %1394 = vmatpush1.msra.mxu0 0.0
  %1395 = vmatprep.subr.mxu0 0.0
  %1396 = vmatpush1.msra.mxu0 0.0
  %1397 = vmatprep.subr.mxu0 0.0
  %1398 = vmatpush1.msra.mxu0 0.0
  %1399 = vmatprep.subr.mxu0 0.0
  %1400 = vmatpush1.msra.mxu0 0.0
  %1401 = vmatprep.subr.mxu0 0.0
  %1402 = vmatpush1.msra.mxu0 0.0
  %1403 = vmatprep.subr.mxu0 0.0
  %1404 = vmatpush1.msra.mxu0 0.0
  %1405 = vmatprep.subr.mxu0 0.0
  %1406 = vmatpush1.msra.mxu0 0.0
  %1407 = vmatprep.subr.mxu0 0.0
  %1408 = vmatpush1.msra.mxu0 0.0
  %1409 = vmatprep.subr.mxu0 0.0
  %1410 = vmatpush1.msra.mxu0 0.0
  %1411 = vmatprep.subr.mxu0 0.0
  %1412 = vmatpush1.msra.mxu0 0.0
  %1413 = vmatprep.subr.mxu0 0.0
  %1414 = vmatpush1.msra.mxu0 0.0
  %1415 = vmatprep.subr.mxu0 0.0
  %1416 = vmatpush1.msra.mxu0 0.0
  %1417 = vmatprep.subr.mxu0 0.0
  %1418 = vmatpush1.msra.mxu0 0.0
  %1419 = vmatprep.subr.mxu0 0.0
  %1420 = vmatpush1.msra.mxu0 0.0
  %1421 = vmatprep.subr.mxu0 0.0
  %1422 = vmatpush1.msra.mxu0 0.0
  %1423 = vmatprep.subr.mxu0 0.0
  %1424 = vmatpush1.msra.mxu0 0.0
  %1425 = vmatprep.subr.mxu0 0.0
  %1426 = vmatpush1.msra.mxu0 0.0
  %1427 = vmatprep.subr.mxu0 0.0
  %1428 = vmatpush1.msra.mxu0 0.0
  %1429 = vmatprep.subr.mxu0 0.0
  %1430 = vmatpush1.msra.mxu0 0.0
  %1431 = vmatprep.subr.mxu0 0.0
  %1432 = vmatpush1.msra.mxu0 0.0
  %1433 = vmatprep.mubr.f32.mxu0 0.0
  %1434 = vmatmul.mubr.f32.gmra.mrb[0].mxu0 %v1367
  %v1435 = vpop.f32.mrb[0].mxu0
  %v1436 = vadd.f32 0.0, %v1435
  %v1437 = vpop.f32.mrb[0].mxu0
  %1438 = vdwg.mxu0
  %v1439 = vadd.f32 %v1363, %v1436
  %v1440 = vxor.u32 %v1439, 2147483648
  %v1441 = vmul.f32 %v1440, 1.442695
  %v1442 = vpow.pop %v1441
  %v1443 = vadd.f32 %v1442, 1.0
  %v1444 = vrcp.pop %v1443
  %v1445 = vmul.f32 1.0, %v1444
  %v1446 = vtanh.pop %v1439
  %v1447 = vmul.f32 %v1445, %v1243
  %1449 = vrot.lane.b32.xlu0 %v1446, 64
  %v1450 = vpop.permute.xlu0 %1449
  %v1452 = vmul.f32 %v1445, %v1450
  %1454 = vrot.lane.b32.xlu0 %v1452, 32
  %v1455 = vpop.permute.xlu0 %1454
  %v1457 = vadd.f32 %v1447, %v1455
  %v1458 = vtanh.pop %v1457
  %1460 = vrot.lane.b32.xlu0 %v1458, 64
  %v1461 = vpop.permute.xlu0 %1460
  %v1463 = vmul.f32 %v1445, %v1461
  %v1464 = vsel %vm460, %v1463, %v1242
  %v1465 = vsel %vm460, %v1457, %v1243
  %v1466 = vsel %vm460, %v1463, 0.0
  %1468 = vrot.lane.b32.xlu0 %v1466, 32
  %v1469 = vpop.permute.xlu0 %1468
  %s1471 = scalar_lea.vmem %s5, 48
  %1472 = vst.msk [vmem:[%s1471] sm:$0xff] %vm38, %v1469
  %s1473 = scalar_lea.vmem %s145, 8
  %v1474 = vld [vmem:[%s1473] sm:$0xff]
  %1476 = vrot.lane.b32.xlu0 %v1353, 32
  %v1477 = vpop.permute.xlu0 %1476
  %v1478 = vsel %vm38, %v1477, 0
  %1480 = vmatprep.subr.mxu0 0.0
  %1481 = vmatpush1.msra.mxu0 %v33
  %1482 = vmatprep.subr.mxu0 0.0
  %1483 = vmatpush1.msra.mxu0 %v34
  %1484 = vmatprep.subr.mxu0 0.0
  %1485 = vmatpush1.msra.mxu0 %v35
  %1486 = vmatprep.subr.mxu0 0.0
  %1487 = vmatpush1.msra.mxu0 %v36
  %1488 = vmatprep.subr.mxu0 0.0
  %1489 = vmatpush1.msra.mxu0 0.0
  %1490 = vmatprep.subr.mxu0 0.0
  %1491 = vmatpush1.msra.mxu0 0.0
  %1492 = vmatprep.subr.mxu0 0.0
  %1493 = vmatpush1.msra.mxu0 0.0
  %1494 = vmatprep.subr.mxu0 0.0
  %1495 = vmatpush1.msra.mxu0 0.0
  %1496 = vmatprep.subr.mxu0 0.0
  %1497 = vmatpush1.msra.mxu0 0.0
  %1498 = vmatprep.subr.mxu0 0.0
  %1499 = vmatpush1.msra.mxu0 0.0
  %1500 = vmatprep.subr.mxu0 0.0
  %1501 = vmatpush1.msra.mxu0 0.0
  %1502 = vmatprep.subr.mxu0 0.0
  %1503 = vmatpush1.msra.mxu0 0.0
  %1504 = vmatprep.subr.mxu0 0.0
  %1505 = vmatpush1.msra.mxu0 0.0
  %1506 = vmatprep.subr.mxu0 0.0
  %1507 = vmatpush1.msra.mxu0 0.0
  %1508 = vmatprep.subr.mxu0 0.0
  %1509 = vmatpush1.msra.mxu0 0.0
  %1510 = vmatprep.subr.mxu0 0.0
  %1511 = vmatpush1.msra.mxu0 0.0
  %1512 = vmatprep.subr.mxu0 0.0
  %1513 = vmatpush1.msra.mxu0 0.0
  %1514 = vmatprep.subr.mxu0 0.0
  %1515 = vmatpush1.msra.mxu0 0.0
  %1516 = vmatprep.subr.mxu0 0.0
  %1517 = vmatpush1.msra.mxu0 0.0
  %1518 = vmatprep.subr.mxu0 0.0
  %1519 = vmatpush1.msra.mxu0 0.0
  %1520 = vmatprep.subr.mxu0 0.0
  %1521 = vmatpush1.msra.mxu0 0.0
  %1522 = vmatprep.subr.mxu0 0.0
  %1523 = vmatpush1.msra.mxu0 0.0
  %1524 = vmatprep.subr.mxu0 0.0
  %1525 = vmatpush1.msra.mxu0 0.0
  %1526 = vmatprep.subr.mxu0 0.0
  %1527 = vmatpush1.msra.mxu0 0.0
  %1528 = vmatprep.subr.mxu0 0.0
  %1529 = vmatpush1.msra.mxu0 0.0
  %1530 = vmatprep.subr.mxu0 0.0
  %1531 = vmatpush1.msra.mxu0 0.0
  %1532 = vmatprep.subr.mxu0 0.0
  %1533 = vmatpush1.msra.mxu0 0.0
  %1534 = vmatprep.subr.mxu0 0.0
  %1535 = vmatpush1.msra.mxu0 0.0
  %1536 = vmatprep.subr.mxu0 0.0
  %1537 = vmatpush1.msra.mxu0 0.0
  %1538 = vmatprep.subr.mxu0 0.0
  %1539 = vmatpush1.msra.mxu0 0.0
  %1540 = vmatprep.subr.mxu0 0.0
  %1541 = vmatpush1.msra.mxu0 0.0
  %1542 = vmatprep.subr.mxu0 0.0
  %1543 = vmatpush1.msra.mxu0 0.0
  %1544 = vmatprep.mubr.f32.mxu0 0.0
  %1545 = vmatmul.mubr.f32.gmra.mrb[0].mxu0 %v1478
  %v1546 = vpop.f32.mrb[0].mxu0
  %v1547 = vadd.f32 0.0, %v1546
  %v1548 = vpop.f32.mrb[0].mxu0
  %1549 = vdwg.mxu0
  %v1550 = vadd.f32 %v1474, %v1547
  %v1551 = vxor.u32 %v1550, 2147483648
  %v1552 = vmul.f32 %v1551, 1.442695
  %v1553 = vpow.pop %v1552
  %v1554 = vadd.f32 %v1553, 1.0
  %v1555 = vrcp.pop %v1554
  %v1556 = vmul.f32 1.0, %v1555
  %v1557 = vtanh.pop %v1550
  %v1558 = vmul.f32 %v1556, %v1354
  %1560 = vrot.lane.b32.xlu0 %v1557, 64
  %v1561 = vpop.permute.xlu0 %1560
  %v1563 = vmul.f32 %v1556, %v1561
  %1565 = vrot.lane.b32.xlu0 %v1563, 32
  %v1566 = vpop.permute.xlu0 %1565
  %v1568 = vadd.f32 %v1558, %v1566
  %v1569 = vtanh.pop %v1568
  %1571 = vrot.lane.b32.xlu0 %v1569, 64
  %v1572 = vpop.permute.xlu0 %1571
  %v1574 = vmul.f32 %v1556, %v1572
  %v1575 = vsel %vm351, %v1574, %v1353
  %v1576 = vsel %vm351, %v1568, %v1354
  %v1577 = vsel %vm351, %v1574, 0.0
  %1579 = vrot.lane.b32.xlu0 %v1577, 32
  %v1580 = vpop.permute.xlu0 %1579
  %s1582 = scalar_lea.vmem [#allocation2], 8
  %1583 = vst.msk [vmem:[%s1582] sm:$0xff] %vm38, %v1580
  %s1584 = scalar_lea.vmem %s1, 56
  %v1585 = vld [vmem:[%s1584] sm:$0xff]
  %1587 = vrot.lane.b32.xlu0 %v1464, 32
  %v1588 = vpop.permute.xlu0 %1587
  %v1589 = vsel %vm38, %v1588, 0
  %1591 = vmatprep.subr.mxu0 0.0
  %1592 = vmatpush1.msra.mxu0 %v28
  %1593 = vmatprep.subr.mxu0 0.0
  %1594 = vmatpush1.msra.mxu0 %v29
  %1595 = vmatprep.subr.mxu0 0.0
  %1596 = vmatpush1.msra.mxu0 %v30
  %1597 = vmatprep.subr.mxu0 0.0
  %1598 = vmatpush1.msra.mxu0 %v31
  %1599 = vmatprep.subr.mxu0 0.0
  %1600 = vmatpush1.msra.mxu0 0.0
  %1601 = vmatprep.subr.mxu0 0.0
  %1602 = vmatpush1.msra.mxu0 0.0
  %1603 = vmatprep.subr.mxu0 0.0
  %1604 = vmatpush1.msra.mxu0 0.0
  %1605 = vmatprep.subr.mxu0 0.0
  %1606 = vmatpush1.msra.mxu0 0.0
  %1607 = vmatprep.subr.mxu0 0.0
  %1608 = vmatpush1.msra.mxu0 0.0
  %1609 = vmatprep.subr.mxu0 0.0
  %1610 = vmatpush1.msra.mxu0 0.0
  %1611 = vmatprep.subr.mxu0 0.0
  %1612 = vmatpush1.msra.mxu0 0.0
  %1613 = vmatprep.subr.mxu0 0.0
  %1614 = vmatpush1.msra.mxu0 0.0
  %1615 = vmatprep.subr.mxu0 0.0
  %1616 = vmatpush1.msra.mxu0 0.0
  %1617 = vmatprep.subr.mxu0 0.0
  %1618 = vmatpush1.msra.mxu0 0.0
  %1619 = vmatprep.subr.mxu0 0.0
  %1620 = vmatpush1.msra.mxu0 0.0
  %1621 = vmatprep.subr.mxu0 0.0
  %1622 = vmatpush1.msra.mxu0 0.0
  %1623 = vmatprep.subr.mxu0 0.0
  %1624 = vmatpush1.msra.mxu0 0.0
  %1625 = vmatprep.subr.mxu0 0.0
  %1626 = vmatpush1.msra.mxu0 0.0
  %1627 = vmatprep.subr.mxu0 0.0
  %1628 = vmatpush1.msra.mxu0 0.0
  %1629 = vmatprep.subr.mxu0 0.0
  %1630 = vmatpush1.msra.mxu0 0.0
  %1631 = vmatprep.subr.mxu0 0.0
  %1632 = vmatpush1.msra.mxu0 0.0
  %1633 = vmatprep.subr.mxu0 0.0
  %1634 = vmatpush1.msra.mxu0 0.0
  %1635 = vmatprep.subr.mxu0 0.0
  %1636 = vmatpush1.msra.mxu0 0.0
  %1637 = vmatprep.subr.mxu0 0.0
  %1638 = vmatpush1.msra.mxu0 0.0
  %1639 = vmatprep.subr.mxu0 0.0
  %1640 = vmatpush1.msra.mxu0 0.0
  %1641 = vmatprep.subr.mxu0 0.0
  %1642 = vmatpush1.msra.mxu0 0.0
  %1643 = vmatprep.subr.mxu0 0.0
  %1644 = vmatpush1.msra.mxu0 0.0
  %1645 = vmatprep.subr.mxu0 0.0
  %1646 = vmatpush1.msra.mxu0 0.0
  %1647 = vmatprep.subr.mxu0 0.0
  %1648 = vmatpush1.msra.mxu0 0.0
  %1649 = vmatprep.subr.mxu0 0.0
  %1650 = vmatpush1.msra.mxu0 0.0
  %1651 = vmatprep.subr.mxu0 0.0
  %1652 = vmatpush1.msra.mxu0 0.0
  %1653 = vmatprep.subr.mxu0 0.0
  %1654 = vmatpush1.msra.mxu0 0.0
  %1655 = vmatprep.mubr.f32.mxu0 0.0
  %1656 = vmatmul.mubr.f32.gmra.mrb[0].mxu0 %v1589
  %v1657 = vpop.f32.mrb[0].mxu0
  %v1658 = vadd.f32 0.0, %v1657
  %v1659 = vpop.f32.mrb[0].mxu0
  %1660 = vdwg.mxu0
  %v1661 = vadd.f32 %v1585, %v1658
  %v1662 = vxor.u32 %v1661, 2147483648
  %v1663 = vmul.f32 %v1662, 1.442695
  %v1664 = vpow.pop %v1663
  %v1665 = vadd.f32 %v1664, 1.0
  %v1666 = vrcp.pop %v1665
  %v1667 = vmul.f32 1.0, %v1666
  %v1668 = vtanh.pop %v1661
  %v1669 = vmul.f32 %v1667, %v1465
  %1671 = vrot.lane.b32.xlu0 %v1668, 64
  %v1672 = vpop.permute.xlu0 %1671
  %v1674 = vmul.f32 %v1667, %v1672
  %1676 = vrot.lane.b32.xlu0 %v1674, 32
  %v1677 = vpop.permute.xlu0 %1676
  %v1679 = vadd.f32 %v1669, %v1677
  %v1680 = vtanh.pop %v1679
  %1682 = vrot.lane.b32.xlu0 %v1680, 64
  %v1683 = vpop.permute.xlu0 %1682
  %v1685 = vmul.f32 %v1667, %v1683
  %v1686 = vsel %vm243, %v1685, %v1464
  %v1687 = vsel %vm243, %v1679, %v1465
  %v1688 = vsel %vm243, %v1685, 0.0
  %1690 = vrot.lane.b32.xlu0 %v1688, 32
  %v1691 = vpop.permute.xlu0 %1690
  %s1693 = scalar_lea.vmem %s5, 56
  %1694 = vst.msk [vmem:[%s1693] sm:$0xff] %vm38, %v1691
  %v1695 = vld [vmem:[%s145] sm:$0xff]
  %1697 = vrot.lane.b32.xlu0 %v1575, 32
  %v1698 = vpop.permute.xlu0 %1697
  %v1699 = vsel %vm38, %v1698, 0
  %1701 = vmatprep.subr.mxu0 0.0
  %1702 = vmatpush1.msra.mxu0 %v33
  %1703 = vmatprep.subr.mxu0 0.0
  %1704 = vmatpush1.msra.mxu0 %v34
  %1705 = vmatprep.subr.mxu0 0.0
  %1706 = vmatpush1.msra.mxu0 %v35
  %1707 = vmatprep.subr.mxu0 0.0
  %1708 = vmatpush1.msra.mxu0 %v36
  %1709 = vmatprep.subr.mxu0 0.0
  %1710 = vmatpush1.msra.mxu0 0.0
  %1711 = vmatprep.subr.mxu0 0.0
  %1712 = vmatpush1.msra.mxu0 0.0
  %1713 = vmatprep.subr.mxu0 0.0
  %1714 = vmatpush1.msra.mxu0 0.0
  %1715 = vmatprep.subr.mxu0 0.0
  %1716 = vmatpush1.msra.mxu0 0.0
  %1717 = vmatprep.subr.mxu0 0.0
  %1718 = vmatpush1.msra.mxu0 0.0
  %1719 = vmatprep.subr.mxu0 0.0
  %1720 = vmatpush1.msra.mxu0 0.0
  %1721 = vmatprep.subr.mxu0 0.0
  %1722 = vmatpush1.msra.mxu0 0.0
  %1723 = vmatprep.subr.mxu0 0.0
  %1724 = vmatpush1.msra.mxu0 0.0
  %1725 = vmatprep.subr.mxu0 0.0
  %1726 = vmatpush1.msra.mxu0 0.0
  %1727 = vmatprep.subr.mxu0 0.0
  %1728 = vmatpush1.msra.mxu0 0.0
  %1729 = vmatprep.subr.mxu0 0.0
  %1730 = vmatpush1.msra.mxu0 0.0
  %1731 = vmatprep.subr.mxu0 0.0
  %1732 = vmatpush1.msra.mxu0 0.0
  %1733 = vmatprep.subr.mxu0 0.0
  %1734 = vmatpush1.msra.mxu0 0.0
  %1735 = vmatprep.subr.mxu0 0.0
  %1736 = vmatpush1.msra.mxu0 0.0
  %1737 = vmatprep.subr.mxu0 0.0
  %1738 = vmatpush1.msra.mxu0 0.0
  %1739 = vmatprep.subr.mxu0 0.0
  %1740 = vmatpush1.msra.mxu0 0.0
  %1741 = vmatprep.subr.mxu0 0.0
  %1742 = vmatpush1.msra.mxu0 0.0
  %1743 = vmatprep.subr.mxu0 0.0
  %1744 = vmatpush1.msra.mxu0 0.0
  %1745 = vmatprep.subr.mxu0 0.0
  %1746 = vmatpush1.msra.mxu0 0.0
  %1747 = vmatprep.subr.mxu0 0.0
  %1748 = vmatpush1.msra.mxu0 0.0
  %1749 = vmatprep.subr.mxu0 0.0
  %1750 = vmatpush1.msra.mxu0 0.0
  %1751 = vmatprep.subr.mxu0 0.0
  %1752 = vmatpush1.msra.mxu0 0.0
  %1753 = vmatprep.subr.mxu0 0.0
  %1754 = vmatpush1.msra.mxu0 0.0
  %1755 = vmatprep.subr.mxu0 0.0
  %1756 = vmatpush1.msra.mxu0 0.0
  %1757 = vmatprep.subr.mxu0 0.0
  %1758 = vmatpush1.msra.mxu0 0.0
  %1759 = vmatprep.subr.mxu0 0.0
  %1760 = vmatpush1.msra.mxu0 0.0
  %1761 = vmatprep.subr.mxu0 0.0
  %1762 = vmatpush1.msra.mxu0 0.0
  %1763 = vmatprep.subr.mxu0 0.0
  %1764 = vmatpush1.msra.mxu0 0.0
  %1765 = vmatprep.mubr.f32.mxu0 0.0
  %1766 = vmatmul.mubr.f32.gmra.mrb[0].mxu0 %v1699
  %v1767 = vpop.f32.mrb[0].mxu0
  %v1768 = vadd.f32 0.0, %v1767
  %v1769 = vpop.f32.mrb[0].mxu0
  %1770 = vdwg.mxu0
  %v1771 = vadd.f32 %v1695, %v1768
  %v1772 = vxor.u32 %v1771, 2147483648
  %v1773 = vmul.f32 %v1772, 1.442695
  %v1774 = vpow.pop %v1773
  %v1775 = vadd.f32 %v1774, 1.0
  %v1776 = vrcp.pop %v1775
  %v1777 = vmul.f32 1.0, %v1776
  %v1778 = vtanh.pop %v1771
  %v1779 = vmul.f32 %v1777, %v1576
  %1781 = vrot.lane.b32.xlu0 %v1778, 64
  %v1782 = vpop.permute.xlu0 %1781
  %v1784 = vmul.f32 %v1777, %v1782
  %1786 = vrot.lane.b32.xlu0 %v1784, 32
  %v1787 = vpop.permute.xlu0 %1786
  %v1789 = vadd.f32 %v1779, %v1787
  %v1790 = vtanh.pop %v1789
  %1792 = vrot.lane.b32.xlu0 %v1790, 64
  %v1793 = vpop.permute.xlu0 %1792
  %v1795 = vmul.f32 %v1777, %v1793
  %v1796 = vsel %vm137, %v1795, %v1575
  %v1797 = vsel %vm137, %v1789, %v1576
  %v1798 = vsel %vm137, %v1795, 0.0
  %1800 = vrot.lane.b32.xlu0 %v1798, 32
  %v1801 = vpop.permute.xlu0 %1800
  %1803 = vst.msk [vmem:[#allocation2] sm:$0xff] %vm38, %v1801
  %v1804 = vadd.f32 %v1686, %v1796
  %1806 = vrot.lane.b32.xlu0 %v1804, 32
  %v1807 = vpop.permute.xlu0 %1806
  %1809 = vst.msk [vmem:[%s7] sm:$0xff] %vm38, %v1807
  %v1810 = vadd.f32 %v1687, %v1797
  %1812 = vrot.lane.b32.xlu0 %v1810, 96
  %v1813 = vpop.permute.xlu0 %1812
  %1815 = vst.msk [vmem:[%s8] sm:$0xff] %vm38, %v1813
  %v1816 = vld [vmem:[%s5] sm:$0xff]
  %v1817 = vld [vmem:[%s5 + $0x8] sm:$0xff]
  %v1818 = vld [vmem:[%s5 + $0x10] sm:$0xff]
  %v1819 = vld [vmem:[%s5 + $0x18] sm:$0xff]
  %v1820 = vld [vmem:[%s5 + $0x20] sm:$0xff]
  %v1821 = vld [vmem:[%s5 + $0x28] sm:$0xff]
  %v1822 = vld [vmem:[%s5 + $0x30] sm:$0xff]
  %v1823 = vld [vmem:[%s5 + $0x38] sm:$0xff]
  %v1824 = vld [vmem:[#allocation2] sm:$0xff]
  %v1825 = vld [vmem:[#allocation2 + $0x8] sm:$0xff]
  %v1826 = vld [vmem:[#allocation2 + $0x10] sm:$0xff]
  %v1827 = vld [vmem:[#allocation2 + $0x18] sm:$0xff]
  %v1828 = vld [vmem:[#allocation2 + $0x20] sm:$0xff]
  %v1829 = vld [vmem:[#allocation2 + $0x28] sm:$0xff]
  %v1830 = vld [vmem:[#allocation2 + $0x30] sm:$0xff]
  %v1831 = vld [vmem:[#allocation2 + $0x38] sm:$0xff]
  %v1832 = vadd.f32 %v1816, %v1824
  %v1833 = vadd.f32 %v1817, %v1825
  %v1834 = vadd.f32 %v1818, %v1826
  %v1835 = vadd.f32 %v1819, %v1827
  %v1836 = vadd.f32 %v1820, %v1828
  %v1837 = vadd.f32 %v1821, %v1829
  %v1838 = vadd.f32 %v1822, %v1830
  %v1839 = vadd.f32 %v1823, %v1831
  %1840 = vst.msk [vmem:[%s5] sm:$0xff] %vm38, %v1832
  %1841 = vst.msk [vmem:[%s5 + $0x8] sm:$0xff] %vm38, %v1833
  %1842 = vst.msk [vmem:[%s5 + $0x10] sm:$0xff] %vm38, %v1834
  %1843 = vst.msk [vmem:[%s5 + $0x18] sm:$0xff] %vm38, %v1835
  %1844 = vst.msk [vmem:[%s5 + $0x20] sm:$0xff] %vm38, %v1836
  %1845 = vst.msk [vmem:[%s5 + $0x28] sm:$0xff] %vm38, %v1837
  %1846 = vst.msk [vmem:[%s5 + $0x30] sm:$0xff] %vm38, %v1838
  %1847 = vst.msk [vmem:[%s5 + $0x38] sm:$0xff] %vm38, %v1839
  %v1848 = vld [vmem:[%s3] sm:$0xff]
  %v1849 = vld [vmem:[%s3 + $0x8] sm:$0xff]
  %v1850 = vld [vmem:[%s3 + $0x10] sm:$0xff]
  %v1851 = vld [vmem:[%s3 + $0x18] sm:$0xff]
  %v1852 = vld [vmem:[%s4] sm:$0x1]
  %v1854 = vlaneseq
  %v1855 = vshrl.u32 %v1854, 7
  %v1856 = vsub.s32 0, %v1855
  %v1857 = vrot.slane %v1852, %v1856
  %v1860 = vsel %vm38, %v1832, 0
  %v1863 = vsel %vm38, %v1833, 0
  %v1866 = vsel %vm38, %v1834, 0
  %v1869 = vsel %vm38, %v1835, 0
  %v1872 = vsel %vm38, %v1836, 0
  %v1875 = vsel %vm38, %v1837, 0
  %v1878 = vsel %vm38, %v1838, 0
  %v1881 = vsel %vm38, %v1839, 0
  %1883 = vmatprep.subr.mxu0 0.0
  %1884 = vmatpush1.msra.mxu0 %v1848
  %1885 = vmatprep.subr.mxu0 0.0
  %1886 = vmatpush1.msra.mxu0 %v1849
  %1887 = vmatprep.subr.mxu0 0.0
  %1888 = vmatpush1.msra.mxu0 %v1850
  %1889 = vmatprep.subr.mxu0 0.0
  %1890 = vmatpush1.msra.mxu0 %v1851
  %1891 = vmatprep.subr.mxu0 0.0
  %1892 = vmatpush1.msra.mxu0 0.0
  %1893 = vmatprep.subr.mxu0 0.0
  %1894 = vmatpush1.msra.mxu0 0.0
  %1895 = vmatprep.subr.mxu0 0.0
  %1896 = vmatpush1.msra.mxu0 0.0
  %1897 = vmatprep.subr.mxu0 0.0
  %1898 = vmatpush1.msra.mxu0 0.0
  %1899 = vmatprep.subr.mxu0 0.0
  %1900 = vmatpush1.msra.mxu0 0.0
  %1901 = vmatprep.subr.mxu0 0.0
  %1902 = vmatpush1.msra.mxu0 0.0
  %1903 = vmatprep.subr.mxu0 0.0
  %1904 = vmatpush1.msra.mxu0 0.0
  %1905 = vmatprep.subr.mxu0 0.0
  %1906 = vmatpush1.msra.mxu0 0.0
  %1907 = vmatprep.subr.mxu0 0.0
  %1908 = vmatpush1.msra.mxu0 0.0
  %1909 = vmatprep.subr.mxu0 0.0
  %1910 = vmatpush1.msra.mxu0 0.0
  %1911 = vmatprep.subr.mxu0 0.0
  %1912 = vmatpush1.msra.mxu0 0.0
  %1913 = vmatprep.subr.mxu0 0.0
  %1914 = vmatpush1.msra.mxu0 0.0
  %1915 = vmatprep.subr.mxu0 0.0
  %1916 = vmatpush1.msra.mxu0 0.0
  %1917 = vmatprep.subr.mxu0 0.0
  %1918 = vmatpush1.msra.mxu0 0.0
  %1919 = vmatprep.subr.mxu0 0.0
  %1920 = vmatpush1.msra.mxu0 0.0
  %1921 = vmatprep.subr.mxu0 0.0
  %1922 = vmatpush1.msra.mxu0 0.0
  %1923 = vmatprep.subr.mxu0 0.0
  %1924 = vmatpush1.msra.mxu0 0.0
  %1925 = vmatprep.subr.mxu0 0.0
  %1926 = vmatpush1.msra.mxu0 0.0
  %1927 = vmatprep.subr.mxu0 0.0
  %1928 = vmatpush1.msra.mxu0 0.0
  %1929 = vmatprep.subr.mxu0 0.0
  %1930 = vmatpush1.msra.mxu0 0.0
  %1931 = vmatprep.subr.mxu0 0.0
  %1932 = vmatpush1.msra.mxu0 0.0
  %1933 = vmatprep.subr.mxu0 0.0
  %1934 = vmatpush1.msra.mxu0 0.0
  %1935 = vmatprep.subr.mxu0 0.0
  %1936 = vmatpush1.msra.mxu0 0.0
  %1937 = vmatprep.subr.mxu0 0.0
  %1938 = vmatpush1.msra.mxu0 0.0
  %1939 = vmatprep.subr.mxu0 0.0
  %1940 = vmatpush1.msra.mxu0 0.0
  %1941 = vmatprep.subr.mxu0 0.0
  %1942 = vmatpush1.msra.mxu0 0.0
  %1943 = vmatprep.subr.mxu0 0.0
  %1944 = vmatpush1.msra.mxu0 0.0
  %1945 = vmatprep.subr.mxu0 0.0
  %1946 = vmatpush1.msra.mxu0 0.0
  %1947 = vmatprep.mubr.f32.mxu0 0.0
  %1948 = vmatmul.mubr.f32.gmra.mrb[0].mxu0 %v1860
  %v1949 = vpop.f32.mrb[0].mxu0
  %v1950 = vadd.f32 %v1857, %v1949
  %v1951 = vpop.f32.mrb[0].mxu0
  %1952 = vmatprep.mubr.f32.mxu0 0.0
  %1953 = vmatmul.mubr.f32.gmra.mrb[0].mxu0 %v1863
  %v1954 = vpop.f32.mrb[0].mxu0
  %v1955 = vadd.f32 %v1857, %v1954
  %v1956 = vpop.f32.mrb[0].mxu0
  %1957 = vmatprep.mubr.f32.mxu0 0.0
  %1958 = vmatmul.mubr.f32.gmra.mrb[0].mxu0 %v1866
  %v1959 = vpop.f32.mrb[0].mxu0
  %v1960 = vadd.f32 %v1857, %v1959
  %v1961 = vpop.f32.mrb[0].mxu0
  %1962 = vmatprep.mubr.f32.mxu0 0.0
  %1963 = vmatmul.mubr.f32.gmra.mrb[0].mxu0 %v1869
  %v1964 = vpop.f32.mrb[0].mxu0
  %v1965 = vadd.f32 %v1857, %v1964
  %v1966 = vpop.f32.mrb[0].mxu0
  %1967 = vmatprep.mubr.f32.mxu0 0.0
  %1968 = vmatmul.mubr.f32.gmra.mrb[0].mxu0 %v1872
  %v1969 = vpop.f32.mrb[0].mxu0
  %v1970 = vadd.f32 %v1857, %v1969
  %v1971 = vpop.f32.mrb[0].mxu0
  %1972 = vmatprep.mubr.f32.mxu0 0.0
  %1973 = vmatmul.mubr.f32.gmra.mrb[0].mxu0 %v1875
  %v1974 = vpop.f32.mrb[0].mxu0
  %v1975 = vadd.f32 %v1857, %v1974
  %v1976 = vpop.f32.mrb[0].mxu0
  %1977 = vmatprep.mubr.f32.mxu0 0.0
  %1978 = vmatmul.mubr.f32.gmra.mrb[0].mxu0 %v1878
  %v1979 = vpop.f32.mrb[0].mxu0
  %v1980 = vadd.f32 %v1857, %v1979
  %v1981 = vpop.f32.mrb[0].mxu0
  %1982 = vmatprep.mubr.f32.mxu0 0.0
  %1983 = vmatmul.mubr.f32.gmra.mrb[0].mxu0 %v1881
  %v1984 = vpop.f32.mrb[0].mxu0
  %v1985 = vadd.f32 %v1857, %v1984
  %v1986 = vpop.f32.mrb[0].mxu0
  %1987 = vdwg.mxu0
  %1988 = vst.msk [vmem:[%s6] sm:$0xff] %vm38, %v1950
  %1989 = vst.msk [vmem:[%s6 + $0x8] sm:$0xff] %vm38, %v1955
  %1990 = vst.msk [vmem:[%s6 + $0x10] sm:$0xff] %vm38, %v1960
  %1991 = vst.msk [vmem:[%s6 + $0x18] sm:$0xff] %vm38, %v1965
  %1992 = vst.msk [vmem:[%s6 + $0x20] sm:$0xff] %vm38, %v1970
  %1993 = vst.msk [vmem:[%s6 + $0x28] sm:$0xff] %vm38, %v1975
  %1994 = vst.msk [vmem:[%s6 + $0x30] sm:$0xff] %vm38, %v1980
  %1995 = vst.msk [vmem:[%s6 + $0x38] sm:$0xff] %vm38, %v1985
  // Predicated region
  $region22: #{encoder_forward.1} parent=0 // pred_check
    _
  $region23: #{encoder_forward.1} parent=0 // pred_check_branch
    %1997 = sbr.rel (0) target = $region25
  $region24: #{encoder_forward.1} parent=0 // pred_region
    _
  $region25: #{encoder_forward.1} parent=0 // pred_fallthru
    _
  // Predicated region
  $region26: #{encoder_forward.1} parent=0 // pred_check
    _
  $region27: #{encoder_forward.1} parent=0 // pred_check_branch
    %1999 = sbr.rel (0) target = $region29
  $region28: #{encoder_forward.1} parent=0 // pred_region
    _
  $region29: #{encoder_forward.1} parent=0 // pred_fallthru
    _
  // Predicated region
  $region30: #{encoder_forward.1} parent=0 // pred_check
    _
  $region31: #{encoder_forward.1} parent=0 // pred_check_branch
    %2001 = sbr.rel (0) target = $region33
  $region32: #{encoder_forward.1} parent=0 // pred_region
    _
  $region33: #{encoder_forward.1} parent=0 // pred_fallthru
    _
  // Predicated region
  $region34: #{encoder_forward.1} parent=0 // pred_check
    _
  $region35: #{encoder_forward.1} parent=0 // pred_check_branch
    %2003 = sbr.rel (0) target = $region37
  $region36: #{encoder_forward.1} parent=0 // pred_region
    _
  $region37: #{encoder_forward.1} parent=0 // pred_fallthru
    _
  // Predicated region
  $region38: #{encoder_forward.1} parent=0 // pred_check
    _
  $region39: #{encoder_forward.1} parent=0 // pred_check_branch
    %2005 = sbr.rel (0) target = $region41
  $region40: #{encoder_forward.1} parent=0 // pred_region
    _
  $region41: #{encoder_forward.1} parent=0 // pred_fallthru
    _
  // Predicated region
  $region42: #{encoder_forward.1} parent=0 // pred_check
    _
  $region43: #{encoder_forward.1} parent=0 // pred_check_branch
    %2007 = sbr.rel (0) target = $region45
  $region44: #{encoder_forward.1} parent=0 // pred_region
    _
  $region45: #{encoder_forward.1} parent=0 // pred_fallthru
    _
  // Predicated region
  $region46: #{encoder_forward.1} parent=0 // pred_check
    _
  $region47: #{encoder_forward.1} parent=0 // pred_check_branch
    %2009 = sbr.rel (0) target = $region49
  $region48: #{encoder_forward.1} parent=0 // pred_region
    _
  $region49: #{encoder_forward.1} parent=0 // pred_fallthru
    _
  // Predicated region
  $region50: #{encoder_forward.1} parent=0 // pred_check
    _
  $region51: #{encoder_forward.1} parent=0 // pred_check_branch
    %2011 = sbr.rel (0) target = $region53
  $region52: #{encoder_forward.1} parent=0 // pred_region
    _
  $region53: #{encoder_forward.1} parent=0 // pred_fallthru
    _

</llo_original>
